<compile_context>
chip_gen: v6e
topology: v6e:2x2x1
jax: 0.10.0
libtpu: 0.0.40
codegen_flags: <defaults>
</compile_context>

<pallas_src>
import functools

import jax
import jax.numpy as jnp
from jax import lax
from jax.experimental import pallas as pl
from jax.experimental.pallas import tpu as pltpu

EMBEDDINGS_COUNT = 384   # C  (matches gpt_model.py)
TOKEN_SIZE = 256         # max context (only tril[:T,:T] is ever used)
HEAD_SIZE = 64           # H
DROPOUT = 0.3            # unused at eval time


def _head_kernel(xt_ref, wqkv_ref, ot_ref, *, head_size, tq, seq_len):
    """Grid: (batch,). One grid step processes one full batch element.

    xt_ref   : (1, C, T) VMEM bf16   -- x transposed (projection yields (3H, T))
    wqkv_ref : (3H, C)   VMEM bf16   -- fused [Wq * H^-0.5 ; Wk ; Wv] (nn.Linear layout)
    ot_ref   : (1, H, T) VMEM f32    -- transposed output (lane-dense stores);
                                        wrapper transposes back to (B, T, H).
    """
    H = head_size
    T = seq_len
    n_tiles = T // tq

    # ---- Fused QKV projection (straight-line prologue, once per batch) ----
    # (3H, C) @ (C, T) -> (3H, T); f32 accumulation; N = T is 128-lane dense.
    proj = jnp.dot(wqkv_ref[...], xt_ref[0],
                   preferred_element_type=jnp.float32)            # (3H, T) f32

    q_t = proj[:H, :].astype(jnp.bfloat16)                        # (H, T), pre-scaled
    k = proj[H:2 * H, :].T.astype(jnp.bfloat16)                   # (T, H), one transpose/batch
    v_t = proj[2 * H:, :].astype(jnp.bfloat16)                    # (H, T)

    # ---- Causal attention, statically unrolled over tq-row query tiles ----
    for qi in range(n_tiles):
        row0 = qi * tq
        kv_len = (qi + 1) * tq   # causal: later key blocks are fully masked -> skipped

        # scores^T laid out as (keys, queries): MXU output is 128-lane dense.
        s = jnp.dot(k[:kv_len, :], q_t[:, row0:row0 + tq],
                    preferred_element_type=jnp.float32)           # (kv_len, tq) f32

        # Causal mask: keep key <= global query index (diagonal always kept).
        key_idx = lax.broadcasted_iota(jnp.int32, (kv_len, tq), 0)
        qry_idx = lax.broadcasted_iota(jnp.int32, (kv_len, tq), 1) + row0
        s = jnp.where(key_idx <= qry_idx, s, -jnp.inf)

        # Row-wise softmax over the key axis (axis 0), all in f32.
        m = jnp.max(s, axis=0, keepdims=True)                     # (1, tq)
        p = jnp.exp(s - m)
        p = p * pl.reciprocal(jnp.sum(p, axis=0, keepdims=True), approx=True)

        # out^T tile: (H, kv_len) @ (kv_len, tq) -> (H, tq); lane-dense store.
        o_t = jnp.dot(v_t[:, :kv_len], p.astype(jnp.bfloat16),
                      preferred_element_type=jnp.float32)         # (H, tq) f32
        ot_ref[0, :, row0:row0 + tq] = o_t.astype(ot_ref.dtype)


def head_forward(x, w_key, w_query, w_value, *, tq=128):
    """x: (B, T, C) f32; w_*: (H, C) f32 (PyTorch nn.Linear weight layout)."""
    B, T, C = x.shape
    H = w_key.shape[0]
    assert C == w_key.shape[1] == w_query.shape[1] == w_value.shape[1]
    assert T <= TOKEN_SIZE

    tq = min(tq, T)
    assert T % tq == 0, "sequence length must be a multiple of the query tile"
    n_tiles = T // tq

    scale = H ** (-0.5)
    # Fused QKV weight (3H, C) in bf16, order [query | key | value];
    # the H^-0.5 scale is folded into the query weight.
    w_qkv = jnp.concatenate([w_query * scale, w_key, w_value], axis=0)
    w_qkv = w_qkv.astype(jnp.bfloat16)
    # x transposed to (B, C, T) so the in-kernel projection directly produces
    # q^T / k^T / v^T with T on the 128-lane axis (layout plumbing only).
    x_t = jnp.swapaxes(x, 1, 2).astype(jnp.bfloat16)

    kernel = functools.partial(_head_kernel, head_size=H, tq=tq, seq_len=T)

    # Causal FLOP/transcendental counts (per batch): sum over query tiles of
    # the visible key columns.
    attn_cells = sum((qi + 1) * tq for qi in range(n_tiles)) * tq
    cost = pl.CostEstimate(
        flops=2 * B * T * C * 3 * H + 4 * B * H * attn_cells,
        transcendentals=B * attn_cells,
        bytes_accessed=x_t.size * 2 + w_qkv.size * 2 + B * T * H * 4,
    )

    out_t = pl.pallas_call(
        kernel,
        out_shape=jax.ShapeDtypeStruct((B, H, T), x.dtype),
        grid_spec=pltpu.PrefetchScalarGridSpec(
            num_scalar_prefetch=0,
            grid=(B,),
            in_specs=[
                # x^T: one batch row per grid step
                pl.BlockSpec((1, C, T), lambda b: (b, 0, 0)),
                # fused QKV weight (same block every step -> DMA'd once)
                pl.BlockSpec((3 * H, C), lambda b: (0, 0)),
            ],
            out_specs=pl.BlockSpec((1, H, T), lambda b: (b, 0, 0)),
        ),
        compiler_params=pltpu.CompilerParams(
            # Only grid axis is the batch -> fully parallel (megacore-friendly).
            dimension_semantics=("parallel",),
        ),
        cost_estimate=cost,
    )(x_t, w_qkv)

    # Layout plumbing only: back to the PyTorch (B, T, H) layout.
    return jnp.swapaxes(out_t, 1, 2)


def head_reference(x, w_key, w_query, w_value):
    """Pure-JAX f32 reference mirroring the PyTorch forward (eval mode)."""
    B, T, C = x.shape
    H = w_key.shape[0]
    k = x @ w_key.T
    q = x @ w_query.T
    v = x @ w_value.T
    aff = (q @ jnp.swapaxes(k, -2, -1)) * (H ** -0.5)
    mask = jnp.tril(jnp.ones((T, T), dtype=bool))
    aff = jnp.where(mask, aff, -jnp.inf)
    aff = jax.nn.softmax(aff, axis=-1)
    return aff @ v


if __name__ == "__main__":
    # Module-consistent shapes: C must be 384; T = token_size exercises the
    # query tiling and the causal key-block skipping.
    B, T, C, H = 2, TOKEN_SIZE, EMBEDDINGS_COUNT, HEAD_SIZE

    key = jax.random.PRNGKey(0)
    kx, kk, kq, kv = jax.random.split(key, 4)

    x = jax.random.normal(kx, (B, T, C), dtype=jnp.float32)
    # Deterministic parameter init (same shapes as nn.Linear(C, H, bias=False)).
    bound = 1.0 / (C ** 0.5)
    w_key = jax.random.uniform(kk, (H, C), jnp.float32, -bound, bound)
    w_query = jax.random.uniform(kq, (H, C), jnp.float32, -bound, bound)
    w_value = jax.random.uniform(kv, (H, C), jnp.float32, -bound, bound)

    out = head_forward(x, w_key, w_query, w_value)
    out = jax.block_until_ready(out)

    ref = head_reference(x, w_key, w_query, w_value)
    assert out.shape == (B, T, H)
    # bf16 matmul operands (f32 accumulation) -> loosen tolerance vs f32 ref.
    max_err = float(jnp.max(jnp.abs(out - ref)))
    assert jnp.allclose(out, ref, atol=3e-2, rtol=3e-2), (
        f"mismatch vs reference (max abs err {max_err})")

    print("KERNEL_OK")
</pallas_src>

<mosaic_0001>
module attributes {stable_mosaic.version = 11 : i64} {
  func.func @_head_kernel(%arg0: i32, %arg1: memref<1x384x256xbf16, #tpu.memory_space<vmem>>, %arg2: memref<192x384xbf16, #tpu.memory_space<vmem>>, %arg3: memref<1x64x256xf32, #tpu.memory_space<vmem>>) attributes {dimension_semantics = [#tpu.dimension_semantics<parallel>], iteration_bounds = array<i64: 2>, scalar_prefetch = 0 : i64, scratch_operands = 0 : i64, tpu.core_type = #tpu.core_type<tc>, window_params = [{transform_indices = @transform_0, window_bounds = array<i64: 1, 384, 256>}, {pipeline_mode = #tpu.pipeline_mode<synchronous>, transform_indices = @transform_1, window_bounds = array<i64: 192, 384>}, {transform_indices = @transform_2, window_bounds = array<i64: 1, 64, 256>}]} {
    %c0 = arith.constant 0 : index
    %c0_0 = arith.constant 0 : index
    %0 = vector.load %arg2[%c0, %c0_0] : memref<192x384xbf16, #tpu.memory_space<vmem>>, vector<192x384xbf16>
    %c0_1 = arith.constant 0 : index
    %c0_2 = arith.constant 0 : index
    %c0_3 = arith.constant 0 : index
    %1 = vector.load %arg1[%c0_1, %c0_2, %c0_3] : memref<1x384x256xbf16, #tpu.memory_space<vmem>>, vector<1x384x256xbf16>
    %2 = vector.shape_cast %1 : vector<1x384x256xbf16> to vector<384x256xbf16>
    %cst = arith.constant dense<0.000000e+00> : vector<192x256xf32>
    %3 = tpu.matmul %0, %2, %cst {dimension_numbers = #tpu.dot_dimension_numbers<[1], [0], [0], [1], [0, 0, 1, 1], [], []>} : vector<192x384xbf16>, vector<384x256xbf16>, vector<192x256xf32> -> vector<192x256xf32>
    %4 = vector.extract_strided_slice %3 {offsets = [0, 0], sizes = [64, 256], strides = [1, 1]} : vector<192x256xf32> to vector<64x256xf32>
    %5 = arith.truncf %4 : vector<64x256xf32> to vector<64x256xbf16>
    %6 = vector.extract_strided_slice %3 {offsets = [64, 0], sizes = [64, 256], strides = [1, 1]} : vector<192x256xf32> to vector<64x256xf32>
    %7 = tpu.transpose %6, [1, 0] : vector<64x256xf32> -> vector<256x64xf32>
    %8 = arith.truncf %7 : vector<256x64xf32> to vector<256x64xbf16>
    %9 = vector.extract_strided_slice %3 {offsets = [128, 0], sizes = [64, 256], strides = [1, 1]} : vector<192x256xf32> to vector<64x256xf32>
    %10 = arith.truncf %9 : vector<64x256xf32> to vector<64x256xbf16>
    %11 = vector.extract_strided_slice %8 {offsets = [0, 0], sizes = [128, 64], strides = [1, 1]} : vector<256x64xbf16> to vector<128x64xbf16>
    %12 = vector.extract_strided_slice %5 {offsets = [0, 0], sizes = [64, 128], strides = [1, 1]} : vector<64x256xbf16> to vector<64x128xbf16>
    %cst_4 = arith.constant dense<0.000000e+00> : vector<128x128xf32>
    %13 = tpu.matmul %11, %12, %cst_4 {dimension_numbers = #tpu.dot_dimension_numbers<[1], [0], [0], [1], [0, 0, 1, 1], [], []>} : vector<128x64xbf16>, vector<64x128xbf16>, vector<128x128xf32> -> vector<128x128xf32>
    %14 = tpu.iota {dimensions = array<i32: 0>} : vector<128x128xi32>
    %15 = tpu.iota {dimensions = array<i32: 1>} : vector<128x128xi32>
    %c0_i32 = arith.constant 0 : i32
    %16 = vector.broadcast %c0_i32 : i32 to vector<128x128xi32>
    %17 = arith.addi %15, %16 : vector<128x128xi32>
    %18 = arith.cmpi sle, %14, %17 : vector<128x128xi32>
    %cst_5 = arith.constant 0xFF800000 : f32
    %19 = vector.broadcast %cst_5 : f32 to vector<128x128xf32>
    %20 = arith.select %18, %13, %19 : vector<128x128xi1>, vector<128x128xf32>
    %cst_6 = arith.constant dense<0xFF800000> : vector<128xf32>
    %21 = vector.multi_reduction <maximumf>, %20, %cst_6 [0] : vector<128x128xf32> to vector<128xf32>
    %22 = vector.shape_cast %21 : vector<128xf32> to vector<1x128xf32>
    %23 = vector.broadcast %22 : vector<1x128xf32> to vector<128x128xf32>
    %24 = arith.subf %20, %23 : vector<128x128xf32>
    %25 = math.exp %24 : vector<128x128xf32>
    %cst_7 = arith.constant dense<0.000000e+00> : vector<128xf32>
    %26 = vector.multi_reduction <add>, %25, %cst_7 [0] : vector<128x128xf32> to vector<128xf32>
    %27 = vector.shape_cast %26 : vector<128xf32> to vector<1x128xf32>
    %28 = tpu.reciprocal %27 {approx = true} : vector<1x128xf32> -> vector<1x128xf32>
    %29 = vector.broadcast %28 : vector<1x128xf32> to vector<128x128xf32>
    %30 = arith.mulf %25, %29 : vector<128x128xf32>
    %31 = vector.extract_strided_slice %10 {offsets = [0, 0], sizes = [64, 128], strides = [1, 1]} : vector<64x256xbf16> to vector<64x128xbf16>
    %32 = arith.truncf %30 : vector<128x128xf32> to vector<128x128xbf16>
    %cst_8 = arith.constant dense<0.000000e+00> : vector<64x128xf32>
    %33 = tpu.matmul %31, %32, %cst_8 {dimension_numbers = #tpu.dot_dimension_numbers<[1], [0], [0], [1], [0, 0, 1, 1], [], []>} : vector<64x128xbf16>, vector<128x128xbf16>, vector<64x128xf32> -> vector<64x128xf32>
    %c0_9 = arith.constant 0 : index
    %c0_10 = arith.constant 0 : index
    %c0_11 = arith.constant 0 : index
    %34 = vector.load %arg3[%c0_9, %c0_10, %c0_11] : memref<1x64x256xf32, #tpu.memory_space<vmem>>, vector<1x64x128xf32>
    %35 = vector.shape_cast %34 : vector<1x64x128xf32> to vector<64x128xf32>
    %36 = vector.shape_cast %33 : vector<64x128xf32> to vector<1x64x128xf32>
    tpu.vector_store %arg3[%c0_9, %c0_10, %c0_11], %36 {strides = array<i32>} : memref<1x64x256xf32, #tpu.memory_space<vmem>>, vector<1x64x128xf32>,
    %37 = vector.extract_strided_slice %5 {offsets = [0, 128], sizes = [64, 128], strides = [1, 1]} : vector<64x256xbf16> to vector<64x128xbf16>
    %cst_12 = arith.constant dense<0.000000e+00> : vector<256x128xf32>
    %38 = tpu.matmul %8, %37, %cst_12 {dimension_numbers = #tpu.dot_dimension_numbers<[1], [0], [0], [1], [0, 0, 1, 1], [], []>} : vector<256x64xbf16>, vector<64x128xbf16>, vector<256x128xf32> -> vector<256x128xf32>
    %39 = tpu.iota {dimensions = array<i32: 0>} : vector<256x128xi32>
    %40 = tpu.iota {dimensions = array<i32: 1>} : vector<256x128xi32>
    %c128_i32 = arith.constant 128 : i32
    %41 = vector.broadcast %c128_i32 : i32 to vector<256x128xi32>
    %42 = arith.addi %40, %41 : vector<256x128xi32>
    %43 = arith.cmpi sle, %39, %42 : vector<256x128xi32>
    %cst_13 = arith.constant 0xFF800000 : f32
    %44 = vector.broadcast %cst_13 : f32 to vector<256x128xf32>
    %45 = arith.select %43, %38, %44 : vector<256x128xi1>, vector<256x128xf32>
    %cst_14 = arith.constant dense<0xFF800000> : vector<128xf32>
    %46 = vector.multi_reduction <maximumf>, %45, %cst_14 [0] : vector<256x128xf32> to vector<128xf32>
    %47 = vector.shape_cast %46 : vector<128xf32> to vector<1x128xf32>
    %48 = vector.broadcast %47 : vector<1x128xf32> to vector<256x128xf32>
    %49 = arith.subf %45, %48 : vector<256x128xf32>
    %50 = math.exp %49 : vector<256x128xf32>
    %cst_15 = arith.constant dense<0.000000e+00> : vector<128xf32>
    %51 = vector.multi_reduction <add>, %50, %cst_15 [0] : vector<256x128xf32> to vector<128xf32>
    %52 = vector.shape_cast %51 : vector<128xf32> to vector<1x128xf32>
    %53 = tpu.reciprocal %52 {approx = true} : vector<1x128xf32> -> vector<1x128xf32>
    %54 = vector.broadcast %53 : vector<1x128xf32> to vector<256x128xf32>
    %55 = arith.mulf %50, %54 : vector<256x128xf32>
    %56 = arith.truncf %55 : vector<256x128xf32> to vector<256x128xbf16>
    %cst_16 = arith.constant dense<0.000000e+00> : vector<64x128xf32>
    %57 = tpu.matmul %10, %56, %cst_16 {dimension_numbers = #tpu.dot_dimension_numbers<[1], [0], [0], [1], [0, 0, 1, 1], [], []>} : vector<64x256xbf16>, vector<256x128xbf16>, vector<64x128xf32> -> vector<64x128xf32>
    %c0_17 = arith.constant 0 : index
    %c0_18 = arith.constant 0 : index
    %c128 = arith.constant 128 : index
    %58 = vector.load %arg3[%c0_17, %c0_18, %c128] : memref<1x64x256xf32, #tpu.memory_space<vmem>>, vector<1x64x128xf32>
    %59 = vector.shape_cast %58 : vector<1x64x128xf32> to vector<64x128xf32>
    %60 = vector.shape_cast %57 : vector<64x128xf32> to vector<1x64x128xf32>
    tpu.vector_store %arg3[%c0_17, %c0_18, %c128], %60 {strides = array<i32>} : memref<1x64x256xf32, #tpu.memory_space<vmem>>, vector<1x64x128xf32>,
    return
  }
  func.func @transform_0(%arg0: i32) -> (i32, i32, i32) {
    %c0_i32 = arith.constant 0 : i32
    %c0_i32_0 = arith.constant 0 : i32
    %c0_i32_1 = arith.constant 0 : i32
    return %arg0, %c0_i32, %c0_i32_0 : i32, i32, i32
  }
  func.func @transform_1(%arg0: i32) -> (i32, i32) {
    %c0_i32 = arith.constant 0 : i32
    %c0_i32_0 = arith.constant 0 : i32
    %c0_i32_1 = arith.constant 0 : i32
    return %c0_i32, %c0_i32_0 : i32, i32
  }
  func.func @transform_2(%arg0: i32) -> (i32, i32, i32) {
    %c0_i32 = arith.constant 0 : i32
    %c0_i32_0 = arith.constant 0 : i32
    %c0_i32_1 = arith.constant 0 : i32
    return %arg0, %c0_i32, %c0_i32_0 : i32, i32, i32
  }
}

</mosaic_0001>

<llo_original>
// kernel: tpu_custom_call.1
$region0: #{tpu_custom_call.1}
  #allocation0 [shape = 'u32[]', space=smem, size = 0x4, offset = 0x4, fixed_abs, tag = 'smem constant byte address 0x4 - core index']
  #allocation1 [shape = 'u32[144,128]{1,0:T(1,128)}', space=vmem, size = 0x12000, scoped, tag = 'internal scratch']
  %s0 = inlined_call_operand.hbm [shape: bf16[2,384,256], index: 0, kind: input, shape index: {}]
  %s1 = inlined_call_operand.hbm [shape: bf16[192,384], index: 1, kind: input, shape index: {}]
  %s2 = inlined_call_operand.hbm [shape: f32[2,64,256], index: 2, kind: output, shape index: {}]
  %s3 = sld [smem:[#allocation0]]
  $region49: #{tpu_custom_call.1} parent=0
    _
  %s5 = ssub.s32 1, %s3
  %s6 = scalar_select 0, %s5, %s3
  $region1: #{tpu_custom_call.1} parent=0
    #allocation2 [shape = 'u8[393216]{0}', space=vmem, size = 0x60000, scoped, tag = 'input window, operand 0']
    #allocation3 [shape = 's32[2]{0}', space=sflag, size = 0x8, scoped, tag = 'scoped memory for tpu_custom_call.1']
    #allocation4 [shape = 's32[2]{0}', space=sflag, size = 0x8, scoped, tag = 'scoped memory for tpu_custom_call.1']
    #allocation5 [shape = 'u8[147456]{0}', space=vmem, size = 0x24000, scoped, tag = 'input window, operand 1, single buffered']
    #allocation6 [shape = 's32[1]{0}', space=sflag, size = 0x4, scoped, tag = 'scoped memory for tpu_custom_call.1']
    #allocation7 [shape = 'u8[131072]{0}', space=vmem, size = 0x20000, scoped, tag = 'output window, operand 0']
    %7 = vsyncpa [#allocation3], 0
    %s8 = scalar_lea.sflag [#allocation3], 1
    %9 = vsyncpa %s8, 0
    %10 = vsyncpa [#allocation6], 0
    %11 = vsyncpa [#allocation4], 0
    %s12 = scalar_lea.sflag [#allocation4], 1
    %13 = vsyncpa %s12, 0
    loop: start=0, step=1, limit=4
    $region2: #{tpu_custom_call.1} parent=1 // loop_pre_header
      _
    $region3: #{tpu_custom_call.1} parent=1 // loop_header
      %s15 = sphi 0, %s19
      %p16 = scmp.ge.s32.totalorder %s15, 4
      %s25 = sphi 0, %s27
      %s28 = sphi 0, %s25
      %s29 = sphi 0, %s28
      %s45 = sphi 0, %s29
      %s49 = sphi 0, %s49
      %s51 = sphi 0, %s49
      %s52 = sphi 0, %s51
      %s66 = sphi 0, %s52
      %s72 = sphi 0, %s74
      %s75 = sphi 0, %s72
      %s76 = sphi 0, %s75
      %s92 = sphi 0, %s76
    $region4: #{tpu_custom_call.1} parent=1 // loop_header_branch
      %18 = sbr.rel (%p16) target = $region8
    $region5: #{tpu_custom_call.1} parent=1 // loop_body
      %s20 = ssub.s32 %s15, 1
      %s21 = ssub.s32 %s15, 2
      %s22 = sadd.s32 %s15, 1
      %s23 = ssub.s32 %s15, %s22
      %p24 = scmp.eq.s32.totalorder %s23, 0
      %s26 = sadd.s32 %s25, 1
      %s27 = scalar_select %p24, %s25, %s26
      %p30 = pneg %p24
      %p31 = scmp.eq.s32.totalorder %s15, 1
      %p32 = por %p30, %p31
      %p33 = scmp.ne.s32.totalorder %s25, %s28
      %p34 = scmp.eq.s32.totalorder %s15, 0
      %p35 = por %p33, %p34
      %p36 = scmp.ne.s32.totalorder %s25, %s28
      %p37 = scmp.eq.s32.totalorder %s20, 1
      %p38 = por %p36, %p37
      %p39 = scmp.ne.s32.totalorder %s28, %s29
      %p40 = scmp.eq.s32.totalorder %s20, 0
      %p41 = por %p39, %p40
      %p42 = scmp.ne.s32.totalorder %s28, %s29
      %p43 = scmp.eq.s32.totalorder %s21, 1
      %p44 = por %p42, %p43
      %p46 = scmp.ne.s32.totalorder %s29, %s45
      %p47 = scmp.eq.s32.totalorder %s21, 0
      %p48 = por %p46, %p47
      %s50 = sadd.s32 %s49, 1
      %p53 = scmp.eq.s32.totalorder %s15, 1
      %p54 = scmp.ne.s32.totalorder %s49, %s51
      %p55 = scmp.eq.s32.totalorder %s15, 0
      %p56 = por %p54, %p55
      %p57 = scmp.ne.s32.totalorder %s49, %s51
      %p58 = scmp.eq.s32.totalorder %s20, 1
      %p59 = por %p57, %p58
      %p60 = scmp.ne.s32.totalorder %s51, %s52
      %p61 = scmp.eq.s32.totalorder %s20, 0
      %p62 = por %p60, %p61
      %p63 = scmp.ne.s32.totalorder %s51, %s52
      %p64 = scmp.eq.s32.totalorder %s21, 1
      %p65 = por %p63, %p64
      %p67 = scmp.ne.s32.totalorder %s52, %s66
      %p68 = scmp.eq.s32.totalorder %s21, 0
      %p69 = por %p67, %p68
      %s70 = ssub.s32 %s15, %s22
      %p71 = scmp.eq.s32.totalorder %s70, 0
      %s73 = sadd.s32 %s72, 1
      %s74 = scalar_select %p71, %s72, %s73
      %p77 = pneg %p71
      %p78 = scmp.eq.s32.totalorder %s15, 1
      %p79 = por %p77, %p78
      %p80 = scmp.ne.s32.totalorder %s72, %s75
      %p81 = scmp.eq.s32.totalorder %s15, 0
      %p82 = por %p80, %p81
      %p83 = scmp.ne.s32.totalorder %s72, %s75
      %p84 = scmp.eq.s32.totalorder %s20, 1
      %p85 = por %p83, %p84
      %p86 = scmp.ne.s32.totalorder %s75, %s76
      %p87 = scmp.eq.s32.totalorder %s20, 0
      %p88 = por %p86, %p87
      %p89 = scmp.ne.s32.totalorder %s75, %s76
      %p90 = scmp.eq.s32.totalorder %s21, 1
      %p91 = por %p89, %p90
      %p93 = scmp.ne.s32.totalorder %s76, %s92
      %p94 = scmp.eq.s32.totalorder %s21, 0
      %p95 = por %p93, %p94
      %p96 = scmp.le.s32.totalorder 1, %s15
      %p97 = scmp.lt.s32.totalorder %s15, 3
      %p98 = pnand %p96, %p97
      %p99 = pneg %p98
      // Predicated region
      $region9: #{tpu_custom_call.1} parent=5 // pred_check
        _
      $region10: #{tpu_custom_call.1} parent=5 // pred_check_branch
        %101 = sbr.rel (%p98) target = $region12
      $region11: #{tpu_custom_call.1} parent=5 // pred_region
        %s102 = ssub.s32 %s15, 1
        // Predicated region
        $region13: #{tpu_custom_call.1} parent=11 // pred_check
          %p103 = pneg %p62
        $region14: #{tpu_custom_call.1} parent=11 // pred_check_branch
          %105 = sbr.rel (%p103) target = $region16
        $region15: #{tpu_custom_call.1} parent=11 // pred_region
          %s107 = ssub.s32 4608, 4608
          %108 = vsyncadd [#allocation6], %s107
          %s109 = sshll.u32 [#allocation5], 4
          %s110 = int_to_ptr.vmem [resolvable:$true] %s109
          %115 = dma.hbm_to_vmem [thread:$0]  %s1, 4608, %s110, [#allocation6], 192, 192, 12
        $region16: #{tpu_custom_call.1} parent=11 // pred_fallthru
          _
      $region12: #{tpu_custom_call.1} parent=5 // pred_fallthru
        _
      %p116 = scmp.lt.s32.totalorder %s15, 2
      // Predicated region
      $region17: #{tpu_custom_call.1} parent=5 // pred_check
        %p117 = pneg %p116
      $region18: #{tpu_custom_call.1} parent=5 // pred_check_branch
        %119 = sbr.rel (%p117) target = $region20
      $region19: #{tpu_custom_call.1} parent=5 // pred_region
        // Predicated region
        $region21: #{tpu_custom_call.1} parent=19 // pred_check
          %p120 = pneg %p35
        $region22: #{tpu_custom_call.1} parent=19 // pred_check_branch
          %122 = sbr.rel (%p120) target = $region24
        $region23: #{tpu_custom_call.1} parent=19 // pred_region
          %s123 = sand.u32 %s25, 1
          %s124 = scalar_lea.sflag [#allocation3], %s123
          %s125 = sand.u32 %s25, 1
          %s126 = smul.addr %s125, 384
          %s127 = scalar_lea.vmem [#allocation2], %s126
          %s129 = ssub.s32 6144, 6144
          %130 = vsyncadd %s124, %s129
          %s131 = smul.addr %s15, 96
          %s132 = smul.addr %s131, 64
          %s133 = scalar_lea.hbm %s0, %s132
          %s134 = sshll.u32 %s127, 4
          %s135 = int_to_ptr.vmem [resolvable:$true] %s134
          %140 = dma.hbm_to_vmem [thread:$0]  %s133, 6144, %s135, %s124, 128, 128, 8
        $region24: #{tpu_custom_call.1} parent=19 // pred_fallthru
          _
      $region20: #{tpu_custom_call.1} parent=5 // pred_fallthru
        _
      %p141 = scmp.le.s32.totalorder 1, %s15
      %p142 = scmp.lt.s32.totalorder %s15, 3
      %p143 = pnand %p141, %p142
      %p144 = pneg %p143
      // Predicated region
      $region25: #{tpu_custom_call.1} parent=5 // pred_check
        _
      $region26: #{tpu_custom_call.1} parent=5 // pred_check_branch
        %146 = sbr.rel (%p143) target = $region28
      $region27: #{tpu_custom_call.1} parent=5 // pred_region
        %s147 = ssub.s32 %s15, 1
        %s148 = sand.u32 %s28, 1
        %s149 = scalar_lea.sflag [#allocation3], %s148
        %s150 = sand.u32 %s28, 1
        %s151 = smul.addr %s150, 384
        %s152 = scalar_lea.vmem [#allocation2], %s151
        // Predicated region
        $region29: #{tpu_custom_call.1} parent=27 // pred_check
          %p153 = pneg %p41
        $region30: #{tpu_custom_call.1} parent=27 // pred_check_branch
          %155 = sbr.rel (%p153) target = $region32
        $region31: #{tpu_custom_call.1} parent=27 // pred_region
          %156 = dma.done %s149, 6144
        $region32: #{tpu_custom_call.1} parent=27 // pred_fallthru
          _
        // Predicated region
        $region33: #{tpu_custom_call.1} parent=27 // pred_check
          %p157 = pneg %p62
        $region34: #{tpu_custom_call.1} parent=27 // pred_check_branch
          %159 = sbr.rel (%p157) target = $region36
        $region35: #{tpu_custom_call.1} parent=27 // pred_region
          %160 = dma.done [#allocation6], 4608
        $region36: #{tpu_custom_call.1} parent=27 // pred_fallthru
          _
        %s161 = sand.u32 %s28, 1
        %s162 = scalar_lea.sflag [#allocation3], %s161
        %s163 = sand.u32 %s28, 1
        %s164 = smul.addr %s163, 384
        %s165 = scalar_lea.vmem [#allocation2], %s164
        %p166 = pneg %p41
        %p167 = pneg %p38
        %p168 = pneg %p62
        %p169 = pneg %p59
        %p170 = pneg %p88
        %p171 = pneg %p85
        %s172 = sand.u32 %s75, 1
        %s173 = scalar_lea.sflag [#allocation4], %s172
        %s174 = sand.u32 %s75, 1
        %s175 = smul.addr %s174, 128
        %s176 = scalar_lea.vmem [#allocation7], %s175
        %v178 = vld [vmem:[#allocation5] sm:$0xff]
        %v179 = vld [vmem:[#allocation5 + $0x8] sm:$0xf]
        %v180 = vld [vmem:[#allocation5 + $0xc] sm:$0xff]
        %v181 = vld [vmem:[#allocation5 + $0x14] sm:$0xf]
        %v182 = vld [vmem:[#allocation5 + $0x18] sm:$0xff]
        %v183 = vld [vmem:[#allocation5 + $0x20] sm:$0xf]
        %v184 = vld [vmem:[#allocation5 + $0x24] sm:$0xff]
        %v185 = vld [vmem:[#allocation5 + $0x2c] sm:$0xf]
        %v186 = vld [vmem:[#allocation5 + $0x30] sm:$0xff]
        %v187 = vld [vmem:[#allocation5 + $0x38] sm:$0xf]
        %v188 = vld [vmem:[#allocation5 + $0x3c] sm:$0xff]
        %v189 = vld [vmem:[#allocation5 + $0x44] sm:$0xf]
        %v190 = vld [vmem:[#allocation5 + $0x48] sm:$0xff]
        %v191 = vld [vmem:[#allocation5 + $0x50] sm:$0xf]
        %v192 = vld [vmem:[#allocation5 + $0x54] sm:$0xff]
        %v193 = vld [vmem:[#allocation5 + $0x5c] sm:$0xf]
        %v194 = vld [vmem:[#allocation5 + $0x60] sm:$0xff]
        %v195 = vld [vmem:[#allocation5 + $0x68] sm:$0xf]
        %v196 = vld [vmem:[#allocation5 + $0x6c] sm:$0xff]
        %v197 = vld [vmem:[#allocation5 + $0x74] sm:$0xf]
        %v198 = vld [vmem:[#allocation5 + $0x78] sm:$0xff]
        %v199 = vld [vmem:[#allocation5 + $0x80] sm:$0xf]
        %v200 = vld [vmem:[#allocation5 + $0x84] sm:$0xff]
        %v201 = vld [vmem:[#allocation5 + $0x8c] sm:$0xf]
        %v202 = vld [vmem:[#allocation5 + $0x90] sm:$0xff]
        %v203 = vld [vmem:[#allocation5 + $0x98] sm:$0xf]
        %v204 = vld [vmem:[#allocation5 + $0x9c] sm:$0xff]
        %v205 = vld [vmem:[#allocation5 + $0xa4] sm:$0xf]
        %v206 = vld [vmem:[#allocation5 + $0xa8] sm:$0xff]
        %v207 = vld [vmem:[#allocation5 + $0xb0] sm:$0xf]
        %v208 = vld [vmem:[#allocation5 + $0xb4] sm:$0xff]
        %v209 = vld [vmem:[#allocation5 + $0xbc] sm:$0xf]
        %v210 = vld [vmem:[#allocation5 + $0xc0] sm:$0xff]
        %v211 = vld [vmem:[#allocation5 + $0xc8] sm:$0xf]
        %v212 = vld [vmem:[#allocation5 + $0xcc] sm:$0xff]
        %v213 = vld [vmem:[#allocation5 + $0xd4] sm:$0xf]
        %v214 = vld [vmem:[#allocation5 + $0xd8] sm:$0xff]
        %v215 = vld [vmem:[#allocation5 + $0xe0] sm:$0xf]
        %v216 = vld [vmem:[#allocation5 + $0xe4] sm:$0xff]
        %v217 = vld [vmem:[#allocation5 + $0xec] sm:$0xf]
        %v218 = vld [vmem:[#allocation5 + $0xf0] sm:$0xff]
        %v219 = vld [vmem:[#allocation5 + $0xf8] sm:$0xf]
        %v220 = vld [vmem:[#allocation5 + $0xfc] sm:$0xff]
        %v221 = vld [vmem:[#allocation5 + $0x104] sm:$0xf]
        %v222 = vld [vmem:[#allocation5 + $0x108] sm:$0xff]
        %v223 = vld [vmem:[#allocation5 + $0x110] sm:$0xf]
        %v224 = vld [vmem:[#allocation5 + $0x114] sm:$0xff]
        %v225 = vld [vmem:[#allocation5 + $0x11c] sm:$0xf]
        %v226 = vld [vmem:[%s152] sm:$0xff]
        %v227 = vld [vmem:[%s152 + $0x8] sm:$0xff]
        %v228 = vld [vmem:[%s152 + $0x10] sm:$0xff]
        %v229 = vld [vmem:[%s152 + $0x18] sm:$0xff]
        %v230 = vld [vmem:[%s152 + $0x20] sm:$0xff]
        %v231 = vld [vmem:[%s152 + $0x28] sm:$0xff]
        %v232 = vld [vmem:[%s152 + $0x30] sm:$0xff]
        %v233 = vld [vmem:[%s152 + $0x38] sm:$0xff]
        %v234 = vld [vmem:[%s152 + $0x40] sm:$0xff]
        %v235 = vld [vmem:[%s152 + $0x48] sm:$0xff]
        %v236 = vld [vmem:[%s152 + $0x50] sm:$0xff]
        %v237 = vld [vmem:[%s152 + $0x58] sm:$0xff]
        %v238 = vld [vmem:[%s152 + $0x60] sm:$0xff]
        %v239 = vld [vmem:[%s152 + $0x68] sm:$0xff]
        %v240 = vld [vmem:[%s152 + $0x70] sm:$0xff]
        %v241 = vld [vmem:[%s152 + $0x78] sm:$0xff]
        %v242 = vld [vmem:[%s152 + $0x80] sm:$0xff]
        %v243 = vld [vmem:[%s152 + $0x88] sm:$0xff]
        %v244 = vld [vmem:[%s152 + $0x90] sm:$0xff]
        %v245 = vld [vmem:[%s152 + $0x98] sm:$0xff]
        %v246 = vld [vmem:[%s152 + $0xa0] sm:$0xff]
        %v247 = vld [vmem:[%s152 + $0xa8] sm:$0xff]
        %v248 = vld [vmem:[%s152 + $0xb0] sm:$0xff]
        %v249 = vld [vmem:[%s152 + $0xb8] sm:$0xff]
        %v250 = vld [vmem:[%s152 + $0xc0] sm:$0xff]
        %v251 = vld [vmem:[%s152 + $0xc8] sm:$0xff]
        %v252 = vld [vmem:[%s152 + $0xd0] sm:$0xff]
        %v253 = vld [vmem:[%s152 + $0xd8] sm:$0xff]
        %v254 = vld [vmem:[%s152 + $0xe0] sm:$0xff]
        %v255 = vld [vmem:[%s152 + $0xe8] sm:$0xff]
        %v256 = vld [vmem:[%s152 + $0xf0] sm:$0xff]
        %v257 = vld [vmem:[%s152 + $0xf8] sm:$0xff]
        %v258 = vld [vmem:[%s152 + $0x100] sm:$0xff]
        %v259 = vld [vmem:[%s152 + $0x108] sm:$0xff]
        %v260 = vld [vmem:[%s152 + $0x110] sm:$0xff]
        %v261 = vld [vmem:[%s152 + $0x118] sm:$0xff]
        %v262 = vld [vmem:[%s152 + $0x120] sm:$0xff]
        %v263 = vld [vmem:[%s152 + $0x128] sm:$0xff]
        %v264 = vld [vmem:[%s152 + $0x130] sm:$0xff]
        %v265 = vld [vmem:[%s152 + $0x138] sm:$0xff]
        %v266 = vld [vmem:[%s152 + $0x140] sm:$0xff]
        %v267 = vld [vmem:[%s152 + $0x148] sm:$0xff]
        %v268 = vld [vmem:[%s152 + $0x150] sm:$0xff]
        %v269 = vld [vmem:[%s152 + $0x158] sm:$0xff]
        %v270 = vld [vmem:[%s152 + $0x160] sm:$0xff]
        %v271 = vld [vmem:[%s152 + $0x168] sm:$0xff]
        %v272 = vld [vmem:[%s152 + $0x170] sm:$0xff]
        %v273 = vld [vmem:[%s152 + $0x178] sm:$0xff]
        %v322 = vunpack.c.l.b16 %v178
        %v323 = vunpack.c.h.b16 %v178
        %v324 = vunpack.c.l.b16 %v179
        %v325 = vunpack.c.l.b16 %v180
        %v326 = vunpack.c.h.b16 %v180
        %v327 = vunpack.c.l.b16 %v181
        %v328 = vunpack.c.l.b16 %v182
        %v329 = vunpack.c.h.b16 %v182
        %v330 = vunpack.c.l.b16 %v183
        %v331 = vunpack.c.l.b16 %v184
        %v332 = vunpack.c.h.b16 %v184
        %v333 = vunpack.c.l.b16 %v185
        %v334 = vunpack.c.l.b16 %v186
        %v335 = vunpack.c.h.b16 %v186
        %v336 = vunpack.c.l.b16 %v187
        %v337 = vunpack.c.l.b16 %v188
        %v338 = vunpack.c.h.b16 %v188
        %v339 = vunpack.c.l.b16 %v189
        %v340 = vunpack.c.l.b16 %v190
        %v341 = vunpack.c.h.b16 %v190
        %v342 = vunpack.c.l.b16 %v191
        %v343 = vunpack.c.l.b16 %v192
        %v344 = vunpack.c.h.b16 %v192
        %v345 = vunpack.c.l.b16 %v193
        %v346 = vunpack.c.l.b16 %v194
        %v347 = vunpack.c.h.b16 %v194
        %v348 = vunpack.c.l.b16 %v195
        %v349 = vunpack.c.l.b16 %v196
        %v350 = vunpack.c.h.b16 %v196
        %v351 = vunpack.c.l.b16 %v197
        %v352 = vunpack.c.l.b16 %v198
        %v353 = vunpack.c.h.b16 %v198
        %v354 = vunpack.c.l.b16 %v199
        %v355 = vunpack.c.l.b16 %v200
        %v356 = vunpack.c.h.b16 %v200
        %v357 = vunpack.c.l.b16 %v201
        %v358 = vunpack.c.l.b16 %v202
        %v359 = vunpack.c.h.b16 %v202
        %v360 = vunpack.c.l.b16 %v203
        %v361 = vunpack.c.l.b16 %v204
        %v362 = vunpack.c.h.b16 %v204
        %v363 = vunpack.c.l.b16 %v205
        %v364 = vunpack.c.l.b16 %v206
        %v365 = vunpack.c.h.b16 %v206
        %v366 = vunpack.c.l.b16 %v207
        %v367 = vunpack.c.l.b16 %v208
        %v368 = vunpack.c.h.b16 %v208
        %v369 = vunpack.c.l.b16 %v209
        %v370 = vunpack.c.l.b16 %v210
        %v371 = vunpack.c.h.b16 %v210
        %v372 = vunpack.c.l.b16 %v211
        %v373 = vunpack.c.l.b16 %v212
        %v374 = vunpack.c.h.b16 %v212
        %v375 = vunpack.c.l.b16 %v213
        %v376 = vunpack.c.l.b16 %v214
        %v377 = vunpack.c.h.b16 %v214
        %v378 = vunpack.c.l.b16 %v215
        %v379 = vunpack.c.l.b16 %v216
        %v380 = vunpack.c.h.b16 %v216
        %v381 = vunpack.c.l.b16 %v217
        %v382 = vunpack.c.l.b16 %v218
        %v383 = vunpack.c.h.b16 %v218
        %v384 = vunpack.c.l.b16 %v219
        %v385 = vunpack.c.l.b16 %v220
        %v386 = vunpack.c.h.b16 %v220
        %v387 = vunpack.c.l.b16 %v221
        %v388 = vunpack.c.l.b16 %v222
        %v389 = vunpack.c.h.b16 %v222
        %v390 = vunpack.c.l.b16 %v223
        %v391 = vunpack.c.l.b16 %v224
        %v392 = vunpack.c.h.b16 %v224
        %v393 = vunpack.c.l.b16 %v225
        %v394 = vpack.c.b16 %v325, %v322
        %v395 = vpack.c.b16 %v326, %v323
        %v396 = vpack.c.b16 %v327, %v324
        %v397 = vpack.c.b16 %v331, %v328
        %v398 = vpack.c.b16 %v332, %v329
        %v399 = vpack.c.b16 %v333, %v330
        %v400 = vpack.c.b16 %v337, %v334
        %v401 = vpack.c.b16 %v338, %v335
        %v402 = vpack.c.b16 %v339, %v336
        %v403 = vpack.c.b16 %v343, %v340
        %v404 = vpack.c.b16 %v344, %v341
        %v405 = vpack.c.b16 %v345, %v342
        %v406 = vpack.c.b16 %v349, %v346
        %v407 = vpack.c.b16 %v350, %v347
        %v408 = vpack.c.b16 %v351, %v348
        %v409 = vpack.c.b16 %v355, %v352
        %v410 = vpack.c.b16 %v356, %v353
        %v411 = vpack.c.b16 %v357, %v354
        %v412 = vpack.c.b16 %v361, %v358
        %v413 = vpack.c.b16 %v362, %v359
        %v414 = vpack.c.b16 %v363, %v360
        %v415 = vpack.c.b16 %v367, %v364
        %v416 = vpack.c.b16 %v368, %v365
        %v417 = vpack.c.b16 %v369, %v366
        %v418 = vpack.c.b16 %v373, %v370
        %v419 = vpack.c.b16 %v374, %v371
        %v420 = vpack.c.b16 %v375, %v372
        %v421 = vpack.c.b16 %v379, %v376
        %v422 = vpack.c.b16 %v380, %v377
        %v423 = vpack.c.b16 %v381, %v378
        %v424 = vpack.c.b16 %v385, %v382
        %v425 = vpack.c.b16 %v386, %v383
        %v426 = vpack.c.b16 %v387, %v384
        %v427 = vpack.c.b16 %v391, %v388
        %v428 = vpack.c.b16 %v392, %v389
        %v429 = vpack.c.b16 %v393, %v390
        %v514 = vunpack.c.l.b16 %v226
        %v515 = vunpack.c.h.b16 %v226
        %v516 = vunpack.c.l.b16 %v227
        %v517 = vunpack.c.h.b16 %v227
        %v518 = vunpack.c.l.b16 %v228
        %v519 = vunpack.c.h.b16 %v228
        %v520 = vunpack.c.l.b16 %v229
        %v521 = vunpack.c.h.b16 %v229
        %v522 = vunpack.c.l.b16 %v230
        %v523 = vunpack.c.h.b16 %v230
        %v524 = vunpack.c.l.b16 %v231
        %v525 = vunpack.c.h.b16 %v231
        %v526 = vunpack.c.l.b16 %v232
        %v527 = vunpack.c.h.b16 %v232
        %v528 = vunpack.c.l.b16 %v233
        %v529 = vunpack.c.h.b16 %v233
        %v530 = vunpack.c.l.b16 %v234
        %v531 = vunpack.c.h.b16 %v234
        %v532 = vunpack.c.l.b16 %v235
        %v533 = vunpack.c.h.b16 %v235
        %v534 = vunpack.c.l.b16 %v236
        %v535 = vunpack.c.h.b16 %v236
        %v536 = vunpack.c.l.b16 %v237
        %v537 = vunpack.c.h.b16 %v237
        %v538 = vunpack.c.l.b16 %v238
        %v539 = vunpack.c.h.b16 %v238
        %v540 = vunpack.c.l.b16 %v239
        %v541 = vunpack.c.h.b16 %v239
        %v542 = vunpack.c.l.b16 %v240
        %v543 = vunpack.c.h.b16 %v240
        %v544 = vunpack.c.l.b16 %v241
        %v545 = vunpack.c.h.b16 %v241
        %v546 = vunpack.c.l.b16 %v242
        %v547 = vunpack.c.h.b16 %v242
        %v548 = vunpack.c.l.b16 %v243
        %v549 = vunpack.c.h.b16 %v243
        %v550 = vunpack.c.l.b16 %v244
        %v551 = vunpack.c.h.b16 %v244
        %v552 = vunpack.c.l.b16 %v245
        %v553 = vunpack.c.h.b16 %v245
        %v554 = vunpack.c.l.b16 %v246
        %v555 = vunpack.c.h.b16 %v246
        %v556 = vunpack.c.l.b16 %v247
        %v557 = vunpack.c.h.b16 %v247
        %v558 = vunpack.c.l.b16 %v248
        %v559 = vunpack.c.h.b16 %v248
        %v560 = vunpack.c.l.b16 %v249
        %v561 = vunpack.c.h.b16 %v249
        %v562 = vunpack.c.l.b16 %v250
        %v563 = vunpack.c.h.b16 %v250
        %v564 = vunpack.c.l.b16 %v251
        %v565 = vunpack.c.h.b16 %v251
        %v566 = vunpack.c.l.b16 %v252
        %v567 = vunpack.c.h.b16 %v252
        %v568 = vunpack.c.l.b16 %v253
        %v569 = vunpack.c.h.b16 %v253
        %v570 = vunpack.c.l.b16 %v254
        %v571 = vunpack.c.h.b16 %v254
        %v572 = vunpack.c.l.b16 %v255
        %v573 = vunpack.c.h.b16 %v255
        %v574 = vunpack.c.l.b16 %v256
        %v575 = vunpack.c.h.b16 %v256
        %v576 = vunpack.c.l.b16 %v257
        %v577 = vunpack.c.h.b16 %v257
        %v578 = vunpack.c.l.b16 %v258
        %v579 = vunpack.c.h.b16 %v258
        %v580 = vunpack.c.l.b16 %v259
        %v581 = vunpack.c.h.b16 %v259
        %v582 = vunpack.c.l.b16 %v260
        %v583 = vunpack.c.h.b16 %v260
        %v584 = vunpack.c.l.b16 %v261
        %v585 = vunpack.c.h.b16 %v261
        %v586 = vunpack.c.l.b16 %v262
        %v587 = vunpack.c.h.b16 %v262
        %v588 = vunpack.c.l.b16 %v263
        %v589 = vunpack.c.h.b16 %v263
        %v590 = vunpack.c.l.b16 %v264
        %v591 = vunpack.c.h.b16 %v264
        %v592 = vunpack.c.l.b16 %v265
        %v593 = vunpack.c.h.b16 %v265
        %v594 = vunpack.c.l.b16 %v266
        %v595 = vunpack.c.h.b16 %v266
        %v596 = vunpack.c.l.b16 %v267
        %v597 = vunpack.c.h.b16 %v267
        %v598 = vunpack.c.l.b16 %v268
        %v599 = vunpack.c.h.b16 %v268
        %v600 = vunpack.c.l.b16 %v269
        %v601 = vunpack.c.h.b16 %v269
        %v602 = vunpack.c.l.b16 %v270
        %v603 = vunpack.c.h.b16 %v270
        %v604 = vunpack.c.l.b16 %v271
        %v605 = vunpack.c.h.b16 %v271
        %v606 = vunpack.c.l.b16 %v272
        %v607 = vunpack.c.h.b16 %v272
        %v608 = vunpack.c.l.b16 %v273
        %v609 = vunpack.c.h.b16 %v273
        %v610 = vpack.c.b16 %v516, %v514
        %v611 = vpack.c.b16 %v517, %v515
        %v612 = vpack.c.b16 %v520, %v518
        %v613 = vpack.c.b16 %v521, %v519
        %v614 = vpack.c.b16 %v524, %v522
        %v615 = vpack.c.b16 %v525, %v523
        %v616 = vpack.c.b16 %v528, %v526
        %v617 = vpack.c.b16 %v529, %v527
        %v618 = vpack.c.b16 %v532, %v530
        %v619 = vpack.c.b16 %v533, %v531
        %v620 = vpack.c.b16 %v536, %v534
        %v621 = vpack.c.b16 %v537, %v535
        %v622 = vpack.c.b16 %v540, %v538
        %v623 = vpack.c.b16 %v541, %v539
        %v624 = vpack.c.b16 %v544, %v542
        %v625 = vpack.c.b16 %v545, %v543
        %v626 = vpack.c.b16 %v548, %v546
        %v627 = vpack.c.b16 %v549, %v547
        %v628 = vpack.c.b16 %v552, %v550
        %v629 = vpack.c.b16 %v553, %v551
        %v630 = vpack.c.b16 %v556, %v554
        %v631 = vpack.c.b16 %v557, %v555
        %v632 = vpack.c.b16 %v560, %v558
        %v633 = vpack.c.b16 %v561, %v559
        %v634 = vpack.c.b16 %v564, %v562
        %v635 = vpack.c.b16 %v565, %v563
        %v636 = vpack.c.b16 %v568, %v566
        %v637 = vpack.c.b16 %v569, %v567
        %v638 = vpack.c.b16 %v572, %v570
        %v639 = vpack.c.b16 %v573, %v571
        %v640 = vpack.c.b16 %v576, %v574
        %v641 = vpack.c.b16 %v577, %v575
        %v642 = vpack.c.b16 %v580, %v578
        %v643 = vpack.c.b16 %v581, %v579
        %v644 = vpack.c.b16 %v584, %v582
        %v645 = vpack.c.b16 %v585, %v583
        %v646 = vpack.c.b16 %v588, %v586
        %v647 = vpack.c.b16 %v589, %v587
        %v648 = vpack.c.b16 %v592, %v590
        %v649 = vpack.c.b16 %v593, %v591
        %v650 = vpack.c.b16 %v596, %v594
        %v651 = vpack.c.b16 %v597, %v595
        %v652 = vpack.c.b16 %v600, %v598
        %v653 = vpack.c.b16 %v601, %v599
        %v654 = vpack.c.b16 %v604, %v602
        %v655 = vpack.c.b16 %v605, %v603
        %v656 = vpack.c.b16 %v608, %v606
        %v657 = vpack.c.b16 %v609, %v607
        %706 = vmatprep.subr.bf16.mxu0 %v625
        %707 = vmatpush1.bf16.msra.mxu0 %v624
        %708 = vmatprep.subr.bf16.mxu0 %v623
        %709 = vmatpush1.bf16.msra.mxu0 %v622
        %710 = vmatprep.subr.bf16.mxu0 %v621
        %711 = vmatpush1.bf16.msra.mxu0 %v620
        %712 = vmatprep.subr.bf16.mxu0 %v619
        %713 = vmatpush1.bf16.msra.mxu0 %v618
        %714 = vmatprep.subr.bf16.mxu0 %v617
        %715 = vmatpush1.bf16.msra.mxu0 %v616
        %716 = vmatprep.subr.bf16.mxu0 %v615
        %717 = vmatpush1.bf16.msra.mxu0 %v614
        %718 = vmatprep.subr.bf16.mxu0 %v613
        %719 = vmatpush1.bf16.msra.mxu0 %v612
        %720 = vmatprep.subr.bf16.mxu0 %v611
        %721 = vmatpush1.bf16.msra.mxu0 %v610
        %722 = vmatprep.subr.bf16.mxu0 %v641
        %723 = vmatpush2.bf16.msra.mxu0 %v640
        %724 = vmatprep.subr.bf16.mxu0 %v639
        %725 = vmatpush2.bf16.msra.mxu0 %v638
        %726 = vmatprep.subr.bf16.mxu0 %v637
        %727 = vmatpush2.bf16.msra.mxu0 %v636
        %728 = vmatprep.subr.bf16.mxu0 %v635
        %729 = vmatpush2.bf16.msra.mxu0 %v634
        %730 = vmatprep.subr.bf16.mxu0 %v633
        %731 = vmatpush2.bf16.msra.mxu0 %v632
        %732 = vmatprep.subr.bf16.mxu0 %v631
        %733 = vmatpush2.bf16.msra.mxu0 %v630
        %734 = vmatprep.subr.bf16.mxu0 %v629
        %735 = vmatpush2.bf16.msra.mxu0 %v628
        %736 = vmatprep.subr.bf16.mxu0 %v627
        %737 = vmatpush2.bf16.msra.mxu0 %v626
        %738 = vmatprep.mubr.bf16.mxu0 %v395
        %739 = vmatmul.mubr.bf16.gmra.mxu0 %v394
        %v740 = vpop.f32.mrf.mxu0
        %v741 = vadd.f32 0.0, %v740
        %v742 = vpop.f32.mrf.mxu0
        %v743 = vadd.f32 0.0, %v742
        %v744 = vpop.f32.mrf.mxu0
        %v745 = vadd.f32 0.0, %v744
        %v746 = vpop.f32.mrf.mxu0
        %v747 = vadd.f32 0.0, %v746
        %748 = vmatprep.mubr.bf16.mxu0 %v398
        %749 = vmatmul.mubr.bf16.gmra.mxu0 %v397
        %v750 = vpop.f32.mrf.mxu0
        %v751 = vadd.f32 0.0, %v750
        %v752 = vpop.f32.mrf.mxu0
        %v753 = vadd.f32 0.0, %v752
        %v754 = vpop.f32.mrf.mxu0
        %v755 = vadd.f32 0.0, %v754
        %v756 = vpop.f32.mrf.mxu0
        %v757 = vadd.f32 0.0, %v756
        %758 = vmatprep.mubr.bf16.mxu0 %v401
        %759 = vmatmul.mubr.bf16.gmra.mxu0 %v400
        %v760 = vpop.f32.mrf.mxu0
        %v761 = vadd.f32 0.0, %v760
        %v762 = vpop.f32.mrf.mxu0
        %v763 = vadd.f32 0.0, %v762
        %v764 = vpop.f32.mrf.mxu0
        %v765 = vadd.f32 0.0, %v764
        %v766 = vpop.f32.mrf.mxu0
        %v767 = vadd.f32 0.0, %v766
        %768 = vmatprep.mubr.bf16.mxu0 %v404
        %769 = vmatmul.mubr.bf16.gmra.mxu0 %v403
        %v770 = vpop.f32.mrf.mxu0
        %v771 = vadd.f32 0.0, %v770
        %v772 = vpop.f32.mrf.mxu0
        %v773 = vadd.f32 0.0, %v772
        %v774 = vpop.f32.mrf.mxu0
        %v775 = vadd.f32 0.0, %v774
        %v776 = vpop.f32.mrf.mxu0
        %v777 = vadd.f32 0.0, %v776
        %778 = vmatprep.mubr.bf16.mxu0 %v407
        %779 = vmatmul.mubr.bf16.gmra.mxu0 %v406
        %v780 = vpop.f32.mrf.mxu0
        %v781 = vadd.f32 0.0, %v780
        %v782 = vpop.f32.mrf.mxu0
        %v783 = vadd.f32 0.0, %v782
        %v784 = vpop.f32.mrf.mxu0
        %v785 = vadd.f32 0.0, %v784
        %v786 = vpop.f32.mrf.mxu0
        %v787 = vadd.f32 0.0, %v786
        %788 = vmatprep.mubr.bf16.mxu0 %v410
        %789 = vmatmul.mubr.bf16.gmra.mxu0 %v409
        %v790 = vpop.f32.mrf.mxu0
        %v791 = vadd.f32 0.0, %v790
        %v792 = vpop.f32.mrf.mxu0
        %v793 = vadd.f32 0.0, %v792
        %v794 = vpop.f32.mrf.mxu0
        %v795 = vadd.f32 0.0, %v794
        %v796 = vpop.f32.mrf.mxu0
        %v797 = vadd.f32 0.0, %v796
        %798 = vmatprep.mubr.bf16.mxu0 %v413
        %799 = vmatmul.mubr.bf16.gmra.mxu0 %v412
        %v800 = vpop.f32.mrf.mxu0
        %v801 = vadd.f32 0.0, %v800
        %v802 = vpop.f32.mrf.mxu0
        %v803 = vadd.f32 0.0, %v802
        %v804 = vpop.f32.mrf.mxu0
        %v805 = vadd.f32 0.0, %v804
        %v806 = vpop.f32.mrf.mxu0
        %v807 = vadd.f32 0.0, %v806
        %808 = vmatprep.mubr.bf16.mxu0 %v416
        %809 = vmatmul.mubr.bf16.gmra.mxu0 %v415
        %v810 = vpop.f32.mrf.mxu0
        %v811 = vadd.f32 0.0, %v810
        %v812 = vpop.f32.mrf.mxu0
        %v813 = vadd.f32 0.0, %v812
        %v814 = vpop.f32.mrf.mxu0
        %v815 = vadd.f32 0.0, %v814
        %v816 = vpop.f32.mrf.mxu0
        %v817 = vadd.f32 0.0, %v816
        %818 = vmatprep.mubr.bf16.mxu0 %v419
        %819 = vmatmul.mubr.bf16.gmra.mxu0 %v418
        %v820 = vpop.f32.mrf.mxu0
        %v821 = vadd.f32 0.0, %v820
        %v822 = vpop.f32.mrf.mxu0
        %v823 = vadd.f32 0.0, %v822
        %v824 = vpop.f32.mrf.mxu0
        %v825 = vadd.f32 0.0, %v824
        %v826 = vpop.f32.mrf.mxu0
        %v827 = vadd.f32 0.0, %v826
        %828 = vmatprep.mubr.bf16.mxu0 %v422
        %829 = vmatmul.mubr.bf16.gmra.mxu0 %v421
        %v830 = vpop.f32.mrf.mxu0
        %v831 = vadd.f32 0.0, %v830
        %v832 = vpop.f32.mrf.mxu0
        %v833 = vadd.f32 0.0, %v832
        %v834 = vpop.f32.mrf.mxu0
        %v835 = vadd.f32 0.0, %v834
        %v836 = vpop.f32.mrf.mxu0
        %v837 = vadd.f32 0.0, %v836
        %838 = vmatprep.mubr.bf16.mxu0 %v425
        %839 = vmatmul.mubr.bf16.gmra.mxu0 %v424
        %v840 = vpop.f32.mrf.mxu0
        %v841 = vadd.f32 0.0, %v840
        %v842 = vpop.f32.mrf.mxu0
        %v843 = vadd.f32 0.0, %v842
        %v844 = vpop.f32.mrf.mxu0
        %v845 = vadd.f32 0.0, %v844
        %v846 = vpop.f32.mrf.mxu0
        %v847 = vadd.f32 0.0, %v846
        %848 = vmatprep.mubr.bf16.mxu0 %v428
        %849 = vmatmul.mubr.bf16.gmra.mxu0 %v427
        %v850 = vpop.f32.mrf.mxu0
        %v851 = vadd.f32 0.0, %v850
        %v852 = vpop.f32.mrf.mxu0
        %v853 = vadd.f32 0.0, %v852
        %v854 = vpop.f32.mrf.mxu0
        %v855 = vadd.f32 0.0, %v854
        %v856 = vpop.f32.mrf.mxu0
        %v857 = vadd.f32 0.0, %v856
        %858 = vdwg.mxu0
        %859 = vmatprep.subr.bf16.mxu0 %v657
        %860 = vmatpush1.bf16.msra.mxu0 %v656
        %861 = vmatprep.subr.bf16.mxu0 %v655
        %862 = vmatpush1.bf16.msra.mxu0 %v654
        %863 = vmatprep.subr.bf16.mxu0 %v653
        %864 = vmatpush1.bf16.msra.mxu0 %v652
        %865 = vmatprep.subr.bf16.mxu0 %v651
        %866 = vmatpush1.bf16.msra.mxu0 %v650
        %867 = vmatprep.subr.bf16.mxu0 %v649
        %868 = vmatpush1.bf16.msra.mxu0 %v648
        %869 = vmatprep.subr.bf16.mxu0 %v647
        %870 = vmatpush1.bf16.msra.mxu0 %v646
        %871 = vmatprep.subr.bf16.mxu0 %v645
        %872 = vmatpush1.bf16.msra.mxu0 %v644
        %873 = vmatprep.subr.bf16.mxu0 %v643
        %874 = vmatpush1.bf16.msra.mxu0 %v642
        %875 = vmatprep.subr.bf16.mxu0 0
        %876 = vmatpush2.bf16.msra.mxu0 0
        %877 = vmatprep.subr.bf16.mxu0 0
        %878 = vmatpush2.bf16.msra.mxu0 0
        %879 = vmatprep.subr.bf16.mxu0 0
        %880 = vmatpush2.bf16.msra.mxu0 0
        %881 = vmatprep.subr.bf16.mxu0 0
        %882 = vmatpush2.bf16.msra.mxu0 0
        %883 = vmatprep.subr.bf16.mxu0 0
        %884 = vmatpush2.bf16.msra.mxu0 0
        %885 = vmatprep.subr.bf16.mxu0 0
        %886 = vmatpush2.bf16.msra.mxu0 0
        %887 = vmatprep.subr.bf16.mxu0 0
        %888 = vmatpush2.bf16.msra.mxu0 0
        %889 = vmatprep.subr.bf16.mxu0 0
        %890 = vmatpush2.bf16.msra.mxu0 0
        %891 = vmatprep.mubr.bf16.mxu0 0
        %892 = vmatmul.mubr.bf16.gmra.mxu0 %v396
        %v893 = vpop.f32.mrf.mxu0
        %v894 = vadd.f32 %v741, %v893
        %v895 = vpop.f32.mrf.mxu0
        %v896 = vadd.f32 %v743, %v895
        %v897 = vpop.f32.mrf.mxu0
        %v898 = vadd.f32 %v745, %v897
        %v899 = vpop.f32.mrf.mxu0
        %v900 = vadd.f32 %v747, %v899
        %901 = vmatprep.mubr.bf16.mxu0 0
        %902 = vmatmul.mubr.bf16.gmra.mxu0 %v399
        %v903 = vpop.f32.mrf.mxu0
        %v904 = vadd.f32 %v751, %v903
        %v905 = vpop.f32.mrf.mxu0
        %v906 = vadd.f32 %v753, %v905
        %v907 = vpop.f32.mrf.mxu0
        %v908 = vadd.f32 %v755, %v907
        %v909 = vpop.f32.mrf.mxu0
        %v910 = vadd.f32 %v757, %v909
        %911 = vmatprep.mubr.bf16.mxu0 0
        %912 = vmatmul.mubr.bf16.gmra.mxu0 %v402
        %v913 = vpop.f32.mrf.mxu0
        %v914 = vadd.f32 %v761, %v913
        %v915 = vpop.f32.mrf.mxu0
        %v916 = vadd.f32 %v763, %v915
        %v917 = vpop.f32.mrf.mxu0
        %v918 = vadd.f32 %v765, %v917
        %v919 = vpop.f32.mrf.mxu0
        %v920 = vadd.f32 %v767, %v919
        %921 = vmatprep.mubr.bf16.mxu0 0
        %922 = vmatmul.mubr.bf16.gmra.mxu0 %v405
        %v923 = vpop.f32.mrf.mxu0
        %v924 = vadd.f32 %v771, %v923
        %v925 = vpop.f32.mrf.mxu0
        %v926 = vadd.f32 %v773, %v925
        %v927 = vpop.f32.mrf.mxu0
        %v928 = vadd.f32 %v775, %v927
        %v929 = vpop.f32.mrf.mxu0
        %v930 = vadd.f32 %v777, %v929
        %931 = vmatprep.mubr.bf16.mxu0 0
        %932 = vmatmul.mubr.bf16.gmra.mxu0 %v408
        %v933 = vpop.f32.mrf.mxu0
        %v934 = vadd.f32 %v781, %v933
        %v935 = vpop.f32.mrf.mxu0
        %v936 = vadd.f32 %v783, %v935
        %v937 = vpop.f32.mrf.mxu0
        %v938 = vadd.f32 %v785, %v937
        %v939 = vpop.f32.mrf.mxu0
        %v940 = vadd.f32 %v787, %v939
        %941 = vmatprep.mubr.bf16.mxu0 0
        %942 = vmatmul.mubr.bf16.gmra.mxu0 %v411
        %v943 = vpop.f32.mrf.mxu0
        %v944 = vadd.f32 %v791, %v943
        %v945 = vpop.f32.mrf.mxu0
        %v946 = vadd.f32 %v793, %v945
        %v947 = vpop.f32.mrf.mxu0
        %v948 = vadd.f32 %v795, %v947
        %v949 = vpop.f32.mrf.mxu0
        %v950 = vadd.f32 %v797, %v949
        %951 = vmatprep.mubr.bf16.mxu0 0
        %952 = vmatmul.mubr.bf16.gmra.mxu0 %v414
        %v953 = vpop.f32.mrf.mxu0
        %v954 = vadd.f32 %v801, %v953
        %v955 = vpop.f32.mrf.mxu0
        %v956 = vadd.f32 %v803, %v955
        %v957 = vpop.f32.mrf.mxu0
        %v958 = vadd.f32 %v805, %v957
        %v959 = vpop.f32.mrf.mxu0
        %v960 = vadd.f32 %v807, %v959
        %961 = vmatprep.mubr.bf16.mxu0 0
        %962 = vmatmul.mubr.bf16.gmra.mxu0 %v417
        %v963 = vpop.f32.mrf.mxu0
        %v964 = vadd.f32 %v811, %v963
        %v965 = vpop.f32.mrf.mxu0
        %v966 = vadd.f32 %v813, %v965
        %v967 = vpop.f32.mrf.mxu0
        %v968 = vadd.f32 %v815, %v967
        %v969 = vpop.f32.mrf.mxu0
        %v970 = vadd.f32 %v817, %v969
        %971 = vmatprep.mubr.bf16.mxu0 0
        %972 = vmatmul.mubr.bf16.gmra.mxu0 %v420
        %v973 = vpop.f32.mrf.mxu0
        %v974 = vadd.f32 %v821, %v973
        %v975 = vpop.f32.mrf.mxu0
        %v976 = vadd.f32 %v823, %v975
        %v977 = vpop.f32.mrf.mxu0
        %v978 = vadd.f32 %v825, %v977
        %v979 = vpop.f32.mrf.mxu0
        %v980 = vadd.f32 %v827, %v979
        %981 = vmatprep.mubr.bf16.mxu0 0
        %982 = vmatmul.mubr.bf16.gmra.mxu0 %v423
        %v983 = vpop.f32.mrf.mxu0
        %v984 = vadd.f32 %v831, %v983
        %v985 = vpop.f32.mrf.mxu0
        %v986 = vadd.f32 %v833, %v985
        %v987 = vpop.f32.mrf.mxu0
        %v988 = vadd.f32 %v835, %v987
        %v989 = vpop.f32.mrf.mxu0
        %v990 = vadd.f32 %v837, %v989
        %991 = vmatprep.mubr.bf16.mxu0 0
        %992 = vmatmul.mubr.bf16.gmra.mxu0 %v426
        %v993 = vpop.f32.mrf.mxu0
        %v994 = vadd.f32 %v841, %v993
        %v995 = vpop.f32.mrf.mxu0
        %v996 = vadd.f32 %v843, %v995
        %v997 = vpop.f32.mrf.mxu0
        %v998 = vadd.f32 %v845, %v997
        %v999 = vpop.f32.mrf.mxu0
        %v1000 = vadd.f32 %v847, %v999
        %1001 = vmatprep.mubr.bf16.mxu0 0
        %1002 = vmatmul.mubr.bf16.gmra.mxu0 %v429
        %v1003 = vpop.f32.mrf.mxu0
        %v1004 = vadd.f32 %v851, %v1003
        %v1005 = vpop.f32.mrf.mxu0
        %v1006 = vadd.f32 %v853, %v1005
        %v1007 = vpop.f32.mrf.mxu0
        %v1008 = vadd.f32 %v855, %v1007
        %v1009 = vpop.f32.mrf.mxu0
        %v1010 = vadd.f32 %v857, %v1009
        %1011 = vdwg.mxu0
        %v1012 = vpack.c.bf16 %v898, %v894
        %v1013 = vpack.c.bf16 %v900, %v896
        %v1014 = vpack.c.bf16 %v908, %v904
        %v1015 = vpack.c.bf16 %v910, %v906
        %v1016 = vpack.c.bf16 %v918, %v914
        %v1017 = vpack.c.bf16 %v920, %v916
        %v1018 = vpack.c.bf16 %v928, %v924
        %v1019 = vpack.c.bf16 %v930, %v926
        %1020 = vxpose.xlu0.b32.start [1/16] %v934, 128
        %1021 = vxpose.xlu0.b32.cont [2/16] %v938, 128
        %1022 = vxpose.xlu0.b32.cont [3/16] %v944, 128
        %1023 = vxpose.xlu0.b32.cont [4/16] %v948, 128
        %1024 = vxpose.xlu0.b32.cont [5/16] %v954, 128
        %1025 = vxpose.xlu0.b32.cont [6/16] %v958, 128
        %1026 = vxpose.xlu0.b32.cont [7/16] %v964, 128
        %1027 = vxpose.xlu0.b32.cont [8/16] %v968, 128
        %1028 = vxpose.xlu0.b32.cont [9/16] 0.0, 128
        %1029 = vxpose.xlu0.b32.cont [10/16] 0.0, 128
        %1030 = vxpose.xlu0.b32.cont [11/16] 0.0, 128
        %1031 = vxpose.xlu0.b32.cont [12/16] 0.0, 128
        %1032 = vxpose.xlu0.b32.cont [13/16] 0.0, 128
        %1033 = vxpose.xlu0.b32.cont [14/16] 0.0, 128
        %1034 = vxpose.xlu0.b32.cont [15/16] 0.0, 128
        %1035 = vxpose.xlu0.b32.end [16/16] 0.0, 128
        %v1036 = vpop.trf.xlu0
        %v1037 = vpop.trf.xlu0
        %v1038 = vpop.trf.xlu0
        %v1039 = vpop.trf.xlu0
        %v1040 = vpop.trf.xlu0
        %v1041 = vpop.trf.xlu0
        %v1042 = vpop.trf.xlu0
        %v1043 = vpop.trf.xlu0
        %v1044 = vpop.trf.xlu0
        %v1045 = vpop.trf.xlu0
        %v1046 = vpop.trf.xlu0
        %v1047 = vpop.trf.xlu0
        %v1048 = vpop.trf.xlu0
        %v1049 = vpop.trf.xlu0
        %v1050 = vpop.trf.xlu0
        %v1051 = vpop.trf.xlu0
        %1052 = vxpose.xlu0.b32.start [1/16] %v936, 128
        %1053 = vxpose.xlu0.b32.cont [2/16] %v940, 128
        %1054 = vxpose.xlu0.b32.cont [3/16] %v946, 128
        %1055 = vxpose.xlu0.b32.cont [4/16] %v950, 128
        %1056 = vxpose.xlu0.b32.cont [5/16] %v956, 128
        %1057 = vxpose.xlu0.b32.cont [6/16] %v960, 128
        %1058 = vxpose.xlu0.b32.cont [7/16] %v966, 128
        %1059 = vxpose.xlu0.b32.cont [8/16] %v970, 128
        %1060 = vxpose.xlu0.b32.cont [9/16] 0.0, 128
        %1061 = vxpose.xlu0.b32.cont [10/16] 0.0, 128
        %1062 = vxpose.xlu0.b32.cont [11/16] 0.0, 128
        %1063 = vxpose.xlu0.b32.cont [12/16] 0.0, 128
        %1064 = vxpose.xlu0.b32.cont [13/16] 0.0, 128
        %1065 = vxpose.xlu0.b32.cont [14/16] 0.0, 128
        %1066 = vxpose.xlu0.b32.cont [15/16] 0.0, 128
        %1067 = vxpose.xlu0.b32.end [16/16] 0.0, 128
        %v1068 = vpop.trf.xlu0
        %v1069 = vpop.trf.xlu0
        %v1070 = vpop.trf.xlu0
        %v1071 = vpop.trf.xlu0
        %v1072 = vpop.trf.xlu0
        %v1073 = vpop.trf.xlu0
        %v1074 = vpop.trf.xlu0
        %v1075 = vpop.trf.xlu0
        %v1076 = vpop.trf.xlu0
        %v1077 = vpop.trf.xlu0
        %v1078 = vpop.trf.xlu0
        %v1079 = vpop.trf.xlu0
        %v1080 = vpop.trf.xlu0
        %v1081 = vpop.trf.xlu0
        %v1082 = vpop.trf.xlu0
        %v1083 = vpop.trf.xlu0
        %v1084 = vpack.c.bf16 %v1037, %v1036
        %v1085 = vpack.c.bf16 %v1039, %v1038
        %v1086 = vpack.c.bf16 %v1041, %v1040
        %v1087 = vpack.c.bf16 %v1043, %v1042
        %v1088 = vpack.c.bf16 %v1045, %v1044
        %v1089 = vpack.c.bf16 %v1047, %v1046
        %v1090 = vpack.c.bf16 %v1049, %v1048
        %v1091 = vpack.c.bf16 %v1051, %v1050
        %v1092 = vpack.c.bf16 %v1069, %v1068
        %v1093 = vpack.c.bf16 %v1071, %v1070
        %v1094 = vpack.c.bf16 %v1073, %v1072
        %v1095 = vpack.c.bf16 %v1075, %v1074
        %v1096 = vpack.c.bf16 %v1077, %v1076
        %v1097 = vpack.c.bf16 %v1079, %v1078
        %v1098 = vpack.c.bf16 %v1081, %v1080
        %v1099 = vpack.c.bf16 %v1083, %v1082
        %v1100 = vpack.c.bf16 %v978, %v974
        %v1101 = vpack.c.bf16 %v980, %v976
        %v1102 = vpack.c.bf16 %v988, %v984
        %v1103 = vpack.c.bf16 %v990, %v986
        %v1104 = vpack.c.bf16 %v998, %v994
        %v1105 = vpack.c.bf16 %v1000, %v996
        %v1106 = vpack.c.bf16 %v1008, %v1004
        %v1107 = vpack.c.bf16 %v1010, %v1006
        %vm1108 = vcmask 523264
        %v1110 = vsel %vm1108, %v1084, 0
        %v1113 = vsel %vm1108, %v1085, 0
        %v1116 = vsel %vm1108, %v1086, 0
        %v1119 = vsel %vm1108, %v1087, 0
        %v1122 = vsel %vm1108, %v1088, 0
        %v1125 = vsel %vm1108, %v1089, 0
        %v1128 = vsel %vm1108, %v1090, 0
        %v1131 = vsel %vm1108, %v1091, 0
        %1133 = vmatprep.subr.bf16.mxu0 0
        %1134 = vmatpush1.bf16.msra.mxu0 0
        %1135 = vmatprep.subr.bf16.mxu0 0
        %1136 = vmatpush1.bf16.msra.mxu0 0
        %1137 = vmatprep.subr.bf16.mxu0 0
        %1138 = vmatpush1.bf16.msra.mxu0 0
        %1139 = vmatprep.subr.bf16.mxu0 0
        %1140 = vmatpush1.bf16.msra.mxu0 0
        %1141 = vmatprep.subr.bf16.mxu0 0
        %1142 = vmatpush1.bf16.msra.mxu0 %v1018
        %1143 = vmatprep.subr.bf16.mxu0 0
        %1144 = vmatpush1.bf16.msra.mxu0 %v1016
        %1145 = vmatprep.subr.bf16.mxu0 0
        %1146 = vmatpush1.bf16.msra.mxu0 %v1014
        %1147 = vmatprep.subr.bf16.mxu0 0
        %1148 = vmatpush1.bf16.msra.mxu0 %v1012
        %1149 = vmatprep.subr.bf16.mxu0 0
        %1150 = vmatpush2.bf16.msra.mxu0 0
        %1151 = vmatprep.subr.bf16.mxu0 0
        %1152 = vmatpush2.bf16.msra.mxu0 0
        %1153 = vmatprep.subr.bf16.mxu0 0
        %1154 = vmatpush2.bf16.msra.mxu0 0
        %1155 = vmatprep.subr.bf16.mxu0 0
        %1156 = vmatpush2.bf16.msra.mxu0 0
        %1157 = vmatprep.subr.bf16.mxu0 0
        %1158 = vmatpush2.bf16.msra.mxu0 0
        %1159 = vmatprep.subr.bf16.mxu0 0
        %1160 = vmatpush2.bf16.msra.mxu0 0
        %1161 = vmatprep.subr.bf16.mxu0 0
        %1162 = vmatpush2.bf16.msra.mxu0 0
        %1163 = vmatprep.subr.bf16.mxu0 0
        %1164 = vmatpush2.bf16.msra.mxu0 0
        %1165 = vmatprep.mubr.bf16.mxu0 0
        %1166 = vmatmul.mubr.bf16.gmra.mxu0 %v1110
        %v1167 = vpop.f32.mrf.mxu0
        %v1168 = vadd.f32 0.0, %v1167
        %v1169 = vpop.f32.mrf.mxu0
        %v1170 = vpop.f32.mrf.mxu0
        %v1171 = vadd.f32 0.0, %v1170
        %v1172 = vpop.f32.mrf.mxu0
        %1173 = vmatprep.mubr.bf16.mxu0 0
        %1174 = vmatmul.mubr.bf16.gmra.mxu0 %v1113
        %v1175 = vpop.f32.mrf.mxu0
        %v1176 = vadd.f32 0.0, %v1175
        %v1177 = vpop.f32.mrf.mxu0
        %v1178 = vpop.f32.mrf.mxu0
        %v1179 = vadd.f32 0.0, %v1178
        %v1180 = vpop.f32.mrf.mxu0
        %1181 = vmatprep.mubr.bf16.mxu0 0
        %1182 = vmatmul.mubr.bf16.gmra.mxu0 %v1116
        %v1183 = vpop.f32.mrf.mxu0
        %v1184 = vadd.f32 0.0, %v1183
        %v1185 = vpop.f32.mrf.mxu0
        %v1186 = vpop.f32.mrf.mxu0
        %v1187 = vadd.f32 0.0, %v1186
        %v1188 = vpop.f32.mrf.mxu0
        %1189 = vmatprep.mubr.bf16.mxu0 0
        %1190 = vmatmul.mubr.bf16.gmra.mxu0 %v1119
        %v1191 = vpop.f32.mrf.mxu0
        %v1192 = vadd.f32 0.0, %v1191
        %v1193 = vpop.f32.mrf.mxu0
        %v1194 = vpop.f32.mrf.mxu0
        %v1195 = vadd.f32 0.0, %v1194
        %v1196 = vpop.f32.mrf.mxu0
        %1197 = vmatprep.mubr.bf16.mxu0 0
        %1198 = vmatmul.mubr.bf16.gmra.mxu0 %v1122
        %v1199 = vpop.f32.mrf.mxu0
        %v1200 = vadd.f32 0.0, %v1199
        %v1201 = vpop.f32.mrf.mxu0
        %v1202 = vpop.f32.mrf.mxu0
        %v1203 = vadd.f32 0.0, %v1202
        %v1204 = vpop.f32.mrf.mxu0
        %1205 = vmatprep.mubr.bf16.mxu0 0
        %1206 = vmatmul.mubr.bf16.gmra.mxu0 %v1125
        %v1207 = vpop.f32.mrf.mxu0
        %v1208 = vadd.f32 0.0, %v1207
        %v1209 = vpop.f32.mrf.mxu0
        %v1210 = vpop.f32.mrf.mxu0
        %v1211 = vadd.f32 0.0, %v1210
        %v1212 = vpop.f32.mrf.mxu0
        %1213 = vmatprep.mubr.bf16.mxu0 0
        %1214 = vmatmul.mubr.bf16.gmra.mxu0 %v1128
        %v1215 = vpop.f32.mrf.mxu0
        %v1216 = vadd.f32 0.0, %v1215
        %v1217 = vpop.f32.mrf.mxu0
        %v1218 = vpop.f32.mrf.mxu0
        %v1219 = vadd.f32 0.0, %v1218
        %v1220 = vpop.f32.mrf.mxu0
        %1221 = vmatprep.mubr.bf16.mxu0 0
        %1222 = vmatmul.mubr.bf16.gmra.mxu0 %v1131
        %v1223 = vpop.f32.mrf.mxu0
        %v1224 = vadd.f32 0.0, %v1223
        %v1225 = vpop.f32.mrf.mxu0
        %v1226 = vpop.f32.mrf.mxu0
        %v1227 = vadd.f32 0.0, %v1226
        %v1228 = vpop.f32.mrf.mxu0
        %1229 = vdwg.mxu0
        %v1230 = vlaneseq
        %v1231 = vshrl.u32 %v1230, 7
        %v1232 = vadd.s32 %v1231, 8
        %v1233 = vadd.s32 %v1231, 16
        %v1234 = vadd.s32 %v1231, 24
        %v1235 = vadd.s32 %v1231, 32
        %v1236 = vadd.s32 %v1231, 40
        %v1237 = vadd.s32 %v1231, 48
        %v1238 = vadd.s32 %v1231, 56
        %v1239 = vadd.s32 %v1231, 64
        %v1240 = vadd.s32 %v1231, 72
        %v1241 = vadd.s32 %v1231, 80
        %v1242 = vadd.s32 %v1231, 88
        %v1243 = vadd.s32 %v1231, 96
        %v1244 = vadd.s32 %v1231, 104
        %v1245 = vadd.s32 %v1231, 112
        %v1246 = vadd.s32 %v1231, 120
        %v1247 = vlaneseq
        %v1248 = vand.u32 %v1247, 127
        %vm1249 = vcmp.le.s32.totalorder %v1231, %v1248
        %vm1250 = vcmp.le.s32.totalorder %v1232, %v1248
        %vm1251 = vcmp.le.s32.totalorder %v1233, %v1248
        %vm1252 = vcmp.le.s32.totalorder %v1234, %v1248
        %vm1253 = vcmp.le.s32.totalorder %v1235, %v1248
        %vm1254 = vcmp.le.s32.totalorder %v1236, %v1248
        %vm1255 = vcmp.le.s32.totalorder %v1237, %v1248
        %vm1256 = vcmp.le.s32.totalorder %v1238, %v1248
        %vm1257 = vcmp.le.s32.totalorder %v1239, %v1248
        %vm1258 = vcmp.le.s32.totalorder %v1240, %v1248
        %vm1259 = vcmp.le.s32.totalorder %v1241, %v1248
        %vm1260 = vcmp.le.s32.totalorder %v1242, %v1248
        %vm1261 = vcmp.le.s32.totalorder %v1243, %v1248
        %vm1262 = vcmp.le.s32.totalorder %v1244, %v1248
        %vm1263 = vcmp.le.s32.totalorder %v1245, %v1248
        %vm1264 = vcmp.le.s32.totalorder %v1246, %v1248
        %v1265 = vsel %vm1249, %v1168, -inf
        %v1266 = vsel %vm1250, %v1171, -inf
        %v1267 = vsel %vm1251, %v1176, -inf
        %v1268 = vsel %vm1252, %v1179, -inf
        %v1269 = vsel %vm1253, %v1184, -inf
        %v1270 = vsel %vm1254, %v1187, -inf
        %v1271 = vsel %vm1255, %v1192, -inf
        %v1272 = vsel %vm1256, %v1195, -inf
        %v1273 = vsel %vm1257, %v1200, -inf
        %v1274 = vsel %vm1258, %v1203, -inf
        %v1275 = vsel %vm1259, %v1208, -inf
        %v1276 = vsel %vm1260, %v1211, -inf
        %v1277 = vsel %vm1261, %v1216, -inf
        %v1278 = vsel %vm1262, %v1219, -inf
        %v1279 = vsel %vm1263, %v1224, -inf
        %v1280 = vsel %vm1264, %v1227, -inf
        %v1281 = vmax.f32 %v1265, %v1269
        %v1282 = vmax.f32 %v1266, %v1270
        %v1283 = vmax.f32 %v1267, %v1271
        %v1284 = vmax.f32 %v1268, %v1272
        %v1285 = vmax.f32 %v1281, %v1273
        %v1286 = vmax.f32 %v1282, %v1274
        %v1287 = vmax.f32 %v1283, %v1275
        %v1288 = vmax.f32 %v1284, %v1276
        %v1289 = vmax.f32 %v1285, %v1277
        %v1290 = vmax.f32 %v1286, %v1278
        %v1291 = vmax.f32 %v1287, %v1279
        %v1292 = vmax.f32 %v1288, %v1280
        %v1293 = vmax.f32 %v1289, %v1290
        %v1294 = vmax.f32 %v1291, %v1292
        %v1295 = vmax.f32 %v1293, %v1294
        %v1296 = vrot.slane %v1295, 4
        %v1297 = vmax.f32 %v1295, %v1296
        %v1298 = vrot.slane %v1297, 2
        %v1299 = vmax.f32 %v1297, %v1298
        %v1300 = vrot.slane %v1299, 1
        %v1301 = vmax.f32 %v1299, %v1300
        %v1302 = vsub.f32 %v1265, %v1301
        %v1303 = vsub.f32 %v1266, %v1301
        %v1304 = vsub.f32 %v1267, %v1301
        %v1305 = vsub.f32 %v1268, %v1301
        %v1306 = vsub.f32 %v1269, %v1301
        %v1307 = vsub.f32 %v1270, %v1301
        %v1308 = vsub.f32 %v1271, %v1301
        %v1309 = vsub.f32 %v1272, %v1301
        %v1310 = vsub.f32 %v1273, %v1301
        %v1311 = vsub.f32 %v1274, %v1301
        %v1312 = vsub.f32 %v1275, %v1301
        %v1313 = vsub.f32 %v1276, %v1301
        %v1314 = vsub.f32 %v1277, %v1301
        %v1315 = vsub.f32 %v1278, %v1301
        %v1316 = vsub.f32 %v1279, %v1301
        %v1317 = vsub.f32 %v1280, %v1301
        %v1318 = vmul.f32 %v1302, 1.442695
        %v1319 = vpow.pop %v1318
        %v1320 = vmul.f32 %v1303, 1.442695
        %v1321 = vpow.pop %v1320
        %v1322 = vmul.f32 %v1304, 1.442695
        %v1323 = vpow.pop %v1322
        %v1324 = vmul.f32 %v1305, 1.442695
        %v1325 = vpow.pop %v1324
        %v1326 = vmul.f32 %v1306, 1.442695
        %v1327 = vpow.pop %v1326
        %v1328 = vmul.f32 %v1307, 1.442695
        %v1329 = vpow.pop %v1328
        %v1330 = vmul.f32 %v1308, 1.442695
        %v1331 = vpow.pop %v1330
        %v1332 = vmul.f32 %v1309, 1.442695
        %v1333 = vpow.pop %v1332
        %v1334 = vmul.f32 %v1310, 1.442695
        %v1335 = vpow.pop %v1334
        %v1336 = vmul.f32 %v1311, 1.442695
        %v1337 = vpow.pop %v1336
        %v1338 = vmul.f32 %v1312, 1.442695
        %v1339 = vpow.pop %v1338
        %v1340 = vmul.f32 %v1313, 1.442695
        %v1341 = vpow.pop %v1340
        %v1342 = vmul.f32 %v1314, 1.442695
        %v1343 = vpow.pop %v1342
        %v1344 = vmul.f32 %v1315, 1.442695
        %v1345 = vpow.pop %v1344
        %v1346 = vmul.f32 %v1316, 1.442695
        %v1347 = vpow.pop %v1346
        %v1348 = vmul.f32 %v1317, 1.442695
        %v1349 = vpow.pop %v1348
        %v1350 = vadd.f32 %v1319, %v1321
        %v1351 = vadd.f32 %v1350, %v1323
        %v1352 = vadd.f32 %v1351, %v1325
        %v1353 = vadd.f32 %v1352, %v1327
        %v1354 = vadd.f32 %v1353, %v1329
        %v1355 = vadd.f32 %v1354, %v1331
        %v1356 = vadd.f32 %v1355, %v1333
        %v1357 = vadd.f32 %v1356, %v1335
        %v1358 = vadd.f32 %v1357, %v1337
        %v1359 = vadd.f32 %v1358, %v1339
        %v1360 = vadd.f32 %v1359, %v1341
        %v1361 = vadd.f32 %v1360, %v1343
        %v1362 = vadd.f32 %v1361, %v1345
        %v1363 = vadd.f32 %v1362, %v1347
        %v1364 = vadd.f32 %v1363, %v1349
        %v1365 = vrot.slane %v1364, 4
        %v1366 = vadd.f32 %v1364, %v1365
        %v1367 = vrot.slane %v1366, 2
        %v1368 = vadd.f32 %v1366, %v1367
        %v1369 = vrot.slane %v1368, 1
        %v1370 = vadd.f32 %v1368, %v1369
        %v1371 = vrcp.pop %v1370
        %v1372 = vmul.f32 %v1319, %v1371
        %v1373 = vmul.f32 %v1321, %v1371
        %v1374 = vmul.f32 %v1323, %v1371
        %v1375 = vmul.f32 %v1325, %v1371
        %v1376 = vmul.f32 %v1327, %v1371
        %v1377 = vmul.f32 %v1329, %v1371
        %v1378 = vmul.f32 %v1331, %v1371
        %v1379 = vmul.f32 %v1333, %v1371
        %v1380 = vmul.f32 %v1335, %v1371
        %v1381 = vmul.f32 %v1337, %v1371
        %v1382 = vmul.f32 %v1339, %v1371
        %v1383 = vmul.f32 %v1341, %v1371
        %v1384 = vmul.f32 %v1343, %v1371
        %v1385 = vmul.f32 %v1345, %v1371
        %v1386 = vmul.f32 %v1347, %v1371
        %v1387 = vmul.f32 %v1349, %v1371
        %v1388 = vpack.c.bf16 %v1373, %v1372
        %v1389 = vpack.c.bf16 %v1375, %v1374
        %v1390 = vpack.c.bf16 %v1377, %v1376
        %v1391 = vpack.c.bf16 %v1379, %v1378
        %v1392 = vpack.c.bf16 %v1381, %v1380
        %v1393 = vpack.c.bf16 %v1383, %v1382
        %v1394 = vpack.c.bf16 %v1385, %v1384
        %v1395 = vpack.c.bf16 %v1387, %v1386
        %1396 = vmatprep.subr.bf16.mxu0 0
        %1397 = vmatpush1.bf16.msra.mxu0 %v1395
        %1398 = vmatprep.subr.bf16.mxu0 0
        %1399 = vmatpush1.bf16.msra.mxu0 %v1394
        %1400 = vmatprep.subr.bf16.mxu0 0
        %1401 = vmatpush1.bf16.msra.mxu0 %v1393
        %1402 = vmatprep.subr.bf16.mxu0 0
        %1403 = vmatpush1.bf16.msra.mxu0 %v1392
        %1404 = vmatprep.subr.bf16.mxu0 0
        %1405 = vmatpush1.bf16.msra.mxu0 %v1391
        %1406 = vmatprep.subr.bf16.mxu0 0
        %1407 = vmatpush1.bf16.msra.mxu0 %v1390
        %1408 = vmatprep.subr.bf16.mxu0 0
        %1409 = vmatpush1.bf16.msra.mxu0 %v1389
        %1410 = vmatprep.subr.bf16.mxu0 0
        %1411 = vmatpush1.bf16.msra.mxu0 %v1388
        %1412 = vmatprep.subr.bf16.mxu0 0
        %1413 = vmatpush2.bf16.msra.mxu0 0
        %1414 = vmatprep.subr.bf16.mxu0 0
        %1415 = vmatpush2.bf16.msra.mxu0 0
        %1416 = vmatprep.subr.bf16.mxu0 0
        %1417 = vmatpush2.bf16.msra.mxu0 0
        %1418 = vmatprep.subr.bf16.mxu0 0
        %1419 = vmatpush2.bf16.msra.mxu0 0
        %1420 = vmatprep.subr.bf16.mxu0 0
        %1421 = vmatpush2.bf16.msra.mxu0 0
        %1422 = vmatprep.subr.bf16.mxu0 0
        %1423 = vmatpush2.bf16.msra.mxu0 0
        %1424 = vmatprep.subr.bf16.mxu0 0
        %1425 = vmatpush2.bf16.msra.mxu0 0
        %1426 = vmatprep.subr.bf16.mxu0 0
        %1427 = vmatpush2.bf16.msra.mxu0 0
        %1428 = vmatprep.mubr.bf16.mxu0 0
        %1429 = vmatmul.mubr.bf16.gmra.mxu0 %v1100
        %v1430 = vpop.f32.mrf.mxu0
        %v1431 = vadd.f32 0.0, %v1430
        %v1432 = vpop.f32.mrf.mxu0
        %v1433 = vpop.f32.mrf.mxu0
        %v1434 = vadd.f32 0.0, %v1433
        %v1435 = vpop.f32.mrf.mxu0
        %1436 = vmatprep.mubr.bf16.mxu0 0
        %1437 = vmatmul.mubr.bf16.gmra.mxu0 %v1102
        %v1438 = vpop.f32.mrf.mxu0
        %v1439 = vadd.f32 0.0, %v1438
        %v1440 = vpop.f32.mrf.mxu0
        %v1441 = vpop.f32.mrf.mxu0
        %v1442 = vadd.f32 0.0, %v1441
        %v1443 = vpop.f32.mrf.mxu0
        %1444 = vmatprep.mubr.bf16.mxu0 0
        %1445 = vmatmul.mubr.bf16.gmra.mxu0 %v1104
        %v1446 = vpop.f32.mrf.mxu0
        %v1447 = vadd.f32 0.0, %v1446
        %v1448 = vpop.f32.mrf.mxu0
        %v1449 = vpop.f32.mrf.mxu0
        %v1450 = vadd.f32 0.0, %v1449
        %v1451 = vpop.f32.mrf.mxu0
        %1452 = vmatprep.mubr.bf16.mxu0 0
        %1453 = vmatmul.mubr.bf16.gmra.mxu0 %v1106
        %v1454 = vpop.f32.mrf.mxu0
        %v1455 = vadd.f32 0.0, %v1454
        %v1456 = vpop.f32.mrf.mxu0
        %v1457 = vpop.f32.mrf.mxu0
        %v1458 = vadd.f32 0.0, %v1457
        %v1459 = vpop.f32.mrf.mxu0
        %1460 = vdwg.mxu0
        %1461 = vst [vmem:[%s176] sm:$0xff] %v1431
        %1462 = vst [vmem:[%s176 + $0x10] sm:$0xff] %v1434
        %1463 = vst [vmem:[%s176 + $0x20] sm:$0xff] %v1439
        %1464 = vst [vmem:[%s176 + $0x30] sm:$0xff] %v1442
        %1465 = vst [vmem:[%s176 + $0x40] sm:$0xff] %v1447
        %1466 = vst [vmem:[%s176 + $0x50] sm:$0xff] %v1450
        %1467 = vst [vmem:[%s176 + $0x60] sm:$0xff] %v1455
        %1468 = vst [vmem:[%s176 + $0x70] sm:$0xff] %v1458
        %v1470 = vsel %vm1108, %v1092, 0
        %v1473 = vsel %vm1108, %v1093, 0
        %v1476 = vsel %vm1108, %v1094, 0
        %v1479 = vsel %vm1108, %v1095, 0
        %v1482 = vsel %vm1108, %v1096, 0
        %v1485 = vsel %vm1108, %v1097, 0
        %v1488 = vsel %vm1108, %v1098, 0
        %v1491 = vsel %vm1108, %v1099, 0
        %1493 = vmatprep.subr.bf16.mxu0 0
        %1494 = vmatpush1.bf16.msra.mxu0 0
        %1495 = vmatprep.subr.bf16.mxu0 0
        %1496 = vmatpush1.bf16.msra.mxu0 0
        %1497 = vmatprep.subr.bf16.mxu0 0
        %1498 = vmatpush1.bf16.msra.mxu0 0
        %1499 = vmatprep.subr.bf16.mxu0 0
        %1500 = vmatpush1.bf16.msra.mxu0 0
        %1501 = vmatprep.subr.bf16.mxu0 0
        %1502 = vmatpush1.bf16.msra.mxu0 %v1019
        %1503 = vmatprep.subr.bf16.mxu0 0
        %1504 = vmatpush1.bf16.msra.mxu0 %v1017
        %1505 = vmatprep.subr.bf16.mxu0 0
        %1506 = vmatpush1.bf16.msra.mxu0 %v1015
        %1507 = vmatprep.subr.bf16.mxu0 0
        %1508 = vmatpush1.bf16.msra.mxu0 %v1013
        %1509 = vmatprep.subr.bf16.mxu0 0
        %1510 = vmatpush2.bf16.msra.mxu0 0
        %1511 = vmatprep.subr.bf16.mxu0 0
        %1512 = vmatpush2.bf16.msra.mxu0 0
        %1513 = vmatprep.subr.bf16.mxu0 0
        %1514 = vmatpush2.bf16.msra.mxu0 0
        %1515 = vmatprep.subr.bf16.mxu0 0
        %1516 = vmatpush2.bf16.msra.mxu0 0
        %1517 = vmatprep.subr.bf16.mxu0 0
        %1518 = vmatpush2.bf16.msra.mxu0 0
        %1519 = vmatprep.subr.bf16.mxu0 0
        %1520 = vmatpush2.bf16.msra.mxu0 0
        %1521 = vmatprep.subr.bf16.mxu0 0
        %1522 = vmatpush2.bf16.msra.mxu0 0
        %1523 = vmatprep.subr.bf16.mxu0 0
        %1524 = vmatpush2.bf16.msra.mxu0 0
        %1525 = vmatprep.mubr.bf16.mxu0 0
        %1526 = vmatmul.mubr.bf16.gmra.mxu0 %v1110
        %v1527 = vpop.f32.mrf.mxu0
        %v1528 = vadd.f32 0.0, %v1527
        %v1529 = vpop.f32.mrf.mxu0
        %v1530 = vpop.f32.mrf.mxu0
        %v1531 = vadd.f32 0.0, %v1530
        %v1532 = vpop.f32.mrf.mxu0
        %1533 = vmatprep.mubr.bf16.mxu0 0
        %1534 = vmatmul.mubr.bf16.gmra.mxu0 %v1113
        %v1535 = vpop.f32.mrf.mxu0
        %v1536 = vadd.f32 0.0, %v1535
        %v1537 = vpop.f32.mrf.mxu0
        %v1538 = vpop.f32.mrf.mxu0
        %v1539 = vadd.f32 0.0, %v1538
        %v1540 = vpop.f32.mrf.mxu0
        %1541 = vmatprep.mubr.bf16.mxu0 0
        %1542 = vmatmul.mubr.bf16.gmra.mxu0 %v1116
        %v1543 = vpop.f32.mrf.mxu0
        %v1544 = vadd.f32 0.0, %v1543
        %v1545 = vpop.f32.mrf.mxu0
        %v1546 = vpop.f32.mrf.mxu0
        %v1547 = vadd.f32 0.0, %v1546
        %v1548 = vpop.f32.mrf.mxu0
        %1549 = vmatprep.mubr.bf16.mxu0 0
        %1550 = vmatmul.mubr.bf16.gmra.mxu0 %v1119
        %v1551 = vpop.f32.mrf.mxu0
        %v1552 = vadd.f32 0.0, %v1551
        %v1553 = vpop.f32.mrf.mxu0
        %v1554 = vpop.f32.mrf.mxu0
        %v1555 = vadd.f32 0.0, %v1554
        %v1556 = vpop.f32.mrf.mxu0
        %1557 = vmatprep.mubr.bf16.mxu0 0
        %1558 = vmatmul.mubr.bf16.gmra.mxu0 %v1122
        %v1559 = vpop.f32.mrf.mxu0
        %v1560 = vadd.f32 0.0, %v1559
        %v1561 = vpop.f32.mrf.mxu0
        %v1562 = vpop.f32.mrf.mxu0
        %v1563 = vadd.f32 0.0, %v1562
        %v1564 = vpop.f32.mrf.mxu0
        %1565 = vmatprep.mubr.bf16.mxu0 0
        %1566 = vmatmul.mubr.bf16.gmra.mxu0 %v1125
        %v1567 = vpop.f32.mrf.mxu0
        %v1568 = vadd.f32 0.0, %v1567
        %v1569 = vpop.f32.mrf.mxu0
        %v1570 = vpop.f32.mrf.mxu0
        %v1571 = vadd.f32 0.0, %v1570
        %v1572 = vpop.f32.mrf.mxu0
        %1573 = vmatprep.mubr.bf16.mxu0 0
        %1574 = vmatmul.mubr.bf16.gmra.mxu0 %v1128
        %v1575 = vpop.f32.mrf.mxu0
        %v1576 = vadd.f32 0.0, %v1575
        %v1577 = vpop.f32.mrf.mxu0
        %v1578 = vpop.f32.mrf.mxu0
        %v1579 = vadd.f32 0.0, %v1578
        %v1580 = vpop.f32.mrf.mxu0
        %1581 = vmatprep.mubr.bf16.mxu0 0
        %1582 = vmatmul.mubr.bf16.gmra.mxu0 %v1131
        %v1583 = vpop.f32.mrf.mxu0
        %v1584 = vadd.f32 0.0, %v1583
        %v1585 = vpop.f32.mrf.mxu0
        %v1586 = vpop.f32.mrf.mxu0
        %v1587 = vadd.f32 0.0, %v1586
        %v1588 = vpop.f32.mrf.mxu0
        %1589 = vmatprep.mubr.bf16.mxu0 0
        %1590 = vmatmul.mubr.bf16.gmra.mxu0 %v1470
        %v1591 = vpop.f32.mrf.mxu0
        %v1592 = vadd.f32 0.0, %v1591
        %v1593 = vpop.f32.mrf.mxu0
        %v1594 = vpop.f32.mrf.mxu0
        %v1595 = vadd.f32 0.0, %v1594
        %v1596 = vpop.f32.mrf.mxu0
        %1597 = vmatprep.mubr.bf16.mxu0 0
        %1598 = vmatmul.mubr.bf16.gmra.mxu0 %v1473
        %v1599 = vpop.f32.mrf.mxu0
        %v1600 = vadd.f32 0.0, %v1599
        %v1601 = vpop.f32.mrf.mxu0
        %v1602 = vpop.f32.mrf.mxu0
        %v1603 = vadd.f32 0.0, %v1602
        %v1604 = vpop.f32.mrf.mxu0
        %1605 = vmatprep.mubr.bf16.mxu0 0
        %1606 = vmatmul.mubr.bf16.gmra.mxu0 %v1476
        %v1607 = vpop.f32.mrf.mxu0
        %v1608 = vadd.f32 0.0, %v1607
        %v1609 = vpop.f32.mrf.mxu0
        %v1610 = vpop.f32.mrf.mxu0
        %v1611 = vadd.f32 0.0, %v1610
        %v1612 = vpop.f32.mrf.mxu0
        %1613 = vmatprep.mubr.bf16.mxu0 0
        %1614 = vmatmul.mubr.bf16.gmra.mxu0 %v1479
        %v1615 = vpop.f32.mrf.mxu0
        %v1616 = vadd.f32 0.0, %v1615
        %v1617 = vpop.f32.mrf.mxu0
        %v1618 = vpop.f32.mrf.mxu0
        %v1619 = vadd.f32 0.0, %v1618
        %v1620 = vpop.f32.mrf.mxu0
        %1621 = vmatprep.mubr.bf16.mxu0 0
        %1622 = vmatmul.mubr.bf16.gmra.mxu0 %v1482
        %v1623 = vpop.f32.mrf.mxu0
        %v1624 = vadd.f32 0.0, %v1623
        %v1625 = vpop.f32.mrf.mxu0
        %v1626 = vpop.f32.mrf.mxu0
        %v1627 = vadd.f32 0.0, %v1626
        %v1628 = vpop.f32.mrf.mxu0
        %1629 = vmatprep.mubr.bf16.mxu0 0
        %1630 = vmatmul.mubr.bf16.gmra.mxu0 %v1485
        %v1631 = vpop.f32.mrf.mxu0
        %v1632 = vadd.f32 0.0, %v1631
        %v1633 = vpop.f32.mrf.mxu0
        %v1634 = vpop.f32.mrf.mxu0
        %v1635 = vadd.f32 0.0, %v1634
        %v1636 = vpop.f32.mrf.mxu0
        %1637 = vmatprep.mubr.bf16.mxu0 0
        %1638 = vmatmul.mubr.bf16.gmra.mxu0 %v1488
        %v1639 = vpop.f32.mrf.mxu0
        %v1640 = vadd.f32 0.0, %v1639
        %v1641 = vpop.f32.mrf.mxu0
        %v1642 = vpop.f32.mrf.mxu0
        %v1643 = vadd.f32 0.0, %v1642
        %v1644 = vpop.f32.mrf.mxu0
        %1645 = vmatprep.mubr.bf16.mxu0 0
        %1646 = vmatmul.mubr.bf16.gmra.mxu0 %v1491
        %v1647 = vpop.f32.mrf.mxu0
        %v1648 = vadd.f32 0.0, %v1647
        %v1649 = vpop.f32.mrf.mxu0
        %v1650 = vpop.f32.mrf.mxu0
        %v1651 = vadd.f32 0.0, %v1650
        %v1652 = vpop.f32.mrf.mxu0
        %1653 = vdwg.mxu0
        %v1654 = vadd.s32 %v1231, 128
        %v1655 = vadd.s32 %v1231, 136
        %v1656 = vadd.s32 %v1231, 144
        %v1657 = vadd.s32 %v1231, 152
        %v1658 = vadd.s32 %v1231, 160
        %v1659 = vadd.s32 %v1231, 168
        %v1660 = vadd.s32 %v1231, 176
        %v1661 = vadd.s32 %v1231, 184
        %v1662 = vadd.s32 %v1231, 192
        %v1663 = vadd.s32 %v1231, 200
        %v1664 = vadd.s32 %v1231, 208
        %v1665 = vadd.s32 %v1231, 216
        %v1666 = vadd.s32 %v1231, 224
        %v1667 = vadd.s32 %v1231, 232
        %v1668 = vadd.s32 %v1231, 240
        %v1669 = vadd.s32 %v1231, 248
        %v1670 = vadd.s32 %v1248, 128
        %vm1671 = vcmp.le.s32.totalorder %v1231, %v1670
        %vm1672 = vcmp.le.s32.totalorder %v1232, %v1670
        %vm1673 = vcmp.le.s32.totalorder %v1233, %v1670
        %vm1674 = vcmp.le.s32.totalorder %v1234, %v1670
        %vm1675 = vcmp.le.s32.totalorder %v1235, %v1670
        %vm1676 = vcmp.le.s32.totalorder %v1236, %v1670
        %vm1677 = vcmp.le.s32.totalorder %v1237, %v1670
        %vm1678 = vcmp.le.s32.totalorder %v1238, %v1670
        %vm1679 = vcmp.le.s32.totalorder %v1239, %v1670
        %vm1680 = vcmp.le.s32.totalorder %v1240, %v1670
        %vm1681 = vcmp.le.s32.totalorder %v1241, %v1670
        %vm1682 = vcmp.le.s32.totalorder %v1242, %v1670
        %vm1683 = vcmp.le.s32.totalorder %v1243, %v1670
        %vm1684 = vcmp.le.s32.totalorder %v1244, %v1670
        %vm1685 = vcmp.le.s32.totalorder %v1245, %v1670
        %vm1686 = vcmp.le.s32.totalorder %v1246, %v1670
        %vm1687 = vcmp.le.s32.totalorder %v1654, %v1670
        %vm1688 = vcmp.le.s32.totalorder %v1655, %v1670
        %vm1689 = vcmp.le.s32.totalorder %v1656, %v1670
        %vm1690 = vcmp.le.s32.totalorder %v1657, %v1670
        %vm1691 = vcmp.le.s32.totalorder %v1658, %v1670
        %vm1692 = vcmp.le.s32.totalorder %v1659, %v1670
        %vm1693 = vcmp.le.s32.totalorder %v1660, %v1670
        %vm1694 = vcmp.le.s32.totalorder %v1661, %v1670
        %vm1695 = vcmp.le.s32.totalorder %v1662, %v1670
        %vm1696 = vcmp.le.s32.totalorder %v1663, %v1670
        %vm1697 = vcmp.le.s32.totalorder %v1664, %v1670
        %vm1698 = vcmp.le.s32.totalorder %v1665, %v1670
        %vm1699 = vcmp.le.s32.totalorder %v1666, %v1670
        %vm1700 = vcmp.le.s32.totalorder %v1667, %v1670
        %vm1701 = vcmp.le.s32.totalorder %v1668, %v1670
        %vm1702 = vcmp.le.s32.totalorder %v1669, %v1670
        %v1703 = vsel %vm1671, %v1528, -inf
        %v1704 = vsel %vm1672, %v1531, -inf
        %v1705 = vsel %vm1673, %v1536, -inf
        %v1706 = vsel %vm1674, %v1539, -inf
        %v1707 = vsel %vm1675, %v1544, -inf
        %v1708 = vsel %vm1676, %v1547, -inf
        %v1709 = vsel %vm1677, %v1552, -inf
        %v1710 = vsel %vm1678, %v1555, -inf
        %v1711 = vsel %vm1679, %v1560, -inf
        %v1712 = vsel %vm1680, %v1563, -inf
        %v1713 = vsel %vm1681, %v1568, -inf
        %v1714 = vsel %vm1682, %v1571, -inf
        %v1715 = vsel %vm1683, %v1576, -inf
        %v1716 = vsel %vm1684, %v1579, -inf
        %v1717 = vsel %vm1685, %v1584, -inf
        %v1718 = vsel %vm1686, %v1587, -inf
        %v1719 = vsel %vm1687, %v1592, -inf
        %v1720 = vsel %vm1688, %v1595, -inf
        %v1721 = vsel %vm1689, %v1600, -inf
        %v1722 = vsel %vm1690, %v1603, -inf
        %v1723 = vsel %vm1691, %v1608, -inf
        %v1724 = vsel %vm1692, %v1611, -inf
        %v1725 = vsel %vm1693, %v1616, -inf
        %v1726 = vsel %vm1694, %v1619, -inf
        %v1727 = vsel %vm1695, %v1624, -inf
        %v1728 = vsel %vm1696, %v1627, -inf
        %v1729 = vsel %vm1697, %v1632, -inf
        %v1730 = vsel %vm1698, %v1635, -inf
        %v1731 = vsel %vm1699, %v1640, -inf
        %v1732 = vsel %vm1700, %v1643, -inf
        %v1733 = vsel %vm1701, %v1648, -inf
        %v1734 = vsel %vm1702, %v1651, -inf
        %v1735 = vmax.f32 %v1703, %v1707
        %v1736 = vmax.f32 %v1704, %v1708
        %v1737 = vmax.f32 %v1705, %v1709
        %v1738 = vmax.f32 %v1706, %v1710
        %v1739 = vmax.f32 %v1735, %v1711
        %v1740 = vmax.f32 %v1736, %v1712
        %v1741 = vmax.f32 %v1737, %v1713
        %v1742 = vmax.f32 %v1738, %v1714
        %v1743 = vmax.f32 %v1739, %v1715
        %v1744 = vmax.f32 %v1740, %v1716
        %v1745 = vmax.f32 %v1741, %v1717
        %v1746 = vmax.f32 %v1742, %v1718
        %v1747 = vmax.f32 %v1743, %v1719
        %v1748 = vmax.f32 %v1744, %v1720
        %v1749 = vmax.f32 %v1745, %v1721
        %v1750 = vmax.f32 %v1746, %v1722
        %v1751 = vmax.f32 %v1747, %v1723
        %v1752 = vmax.f32 %v1748, %v1724
        %v1753 = vmax.f32 %v1749, %v1725
        %v1754 = vmax.f32 %v1750, %v1726
        %v1755 = vmax.f32 %v1751, %v1727
        %v1756 = vmax.f32 %v1752, %v1728
        %v1757 = vmax.f32 %v1753, %v1729
        %v1758 = vmax.f32 %v1754, %v1730
        %v1759 = vmax.f32 %v1755, %v1731
        %v1760 = vmax.f32 %v1756, %v1732
        %v1761 = vmax.f32 %v1757, %v1733
        %v1762 = vmax.f32 %v1758, %v1734
        %v1763 = vmax.f32 %v1759, %v1760
        %v1764 = vmax.f32 %v1761, %v1762
        %v1765 = vmax.f32 %v1763, %v1764
        %v1766 = vrot.slane %v1765, 4
        %v1767 = vmax.f32 %v1765, %v1766
        %v1768 = vrot.slane %v1767, 2
        %v1769 = vmax.f32 %v1767, %v1768
        %v1770 = vrot.slane %v1769, 1
        %v1771 = vmax.f32 %v1769, %v1770
        %v1772 = vsub.f32 %v1703, %v1771
        %v1773 = vsub.f32 %v1704, %v1771
        %v1774 = vsub.f32 %v1705, %v1771
        %v1775 = vsub.f32 %v1706, %v1771
        %v1776 = vsub.f32 %v1707, %v1771
        %v1777 = vsub.f32 %v1708, %v1771
        %v1778 = vsub.f32 %v1709, %v1771
        %v1779 = vsub.f32 %v1710, %v1771
        %v1780 = vsub.f32 %v1711, %v1771
        %v1781 = vsub.f32 %v1712, %v1771
        %v1782 = vsub.f32 %v1713, %v1771
        %v1783 = vsub.f32 %v1714, %v1771
        %v1784 = vsub.f32 %v1715, %v1771
        %v1785 = vsub.f32 %v1716, %v1771
        %v1786 = vsub.f32 %v1717, %v1771
        %v1787 = vsub.f32 %v1718, %v1771
        %v1788 = vsub.f32 %v1719, %v1771
        %v1789 = vsub.f32 %v1720, %v1771
        %v1790 = vsub.f32 %v1721, %v1771
        %v1791 = vsub.f32 %v1722, %v1771
        %v1792 = vsub.f32 %v1723, %v1771
        %v1793 = vsub.f32 %v1724, %v1771
        %v1794 = vsub.f32 %v1725, %v1771
        %v1795 = vsub.f32 %v1726, %v1771
        %v1796 = vsub.f32 %v1727, %v1771
        %v1797 = vsub.f32 %v1728, %v1771
        %v1798 = vsub.f32 %v1729, %v1771
        %v1799 = vsub.f32 %v1730, %v1771
        %v1800 = vsub.f32 %v1731, %v1771
        %v1801 = vsub.f32 %v1732, %v1771
        %v1802 = vsub.f32 %v1733, %v1771
        %v1803 = vsub.f32 %v1734, %v1771
        %v1804 = vmul.f32 %v1772, 1.442695
        %v1805 = vpow.pop %v1804
        %v1806 = vmul.f32 %v1773, 1.442695
        %v1807 = vpow.pop %v1806
        %v1808 = vmul.f32 %v1774, 1.442695
        %v1809 = vpow.pop %v1808
        %v1810 = vmul.f32 %v1775, 1.442695
        %v1811 = vpow.pop %v1810
        %v1812 = vmul.f32 %v1776, 1.442695
        %v1813 = vpow.pop %v1812
        %v1814 = vmul.f32 %v1777, 1.442695
        %v1815 = vpow.pop %v1814
        %v1816 = vmul.f32 %v1778, 1.442695
        %v1817 = vpow.pop %v1816
        %v1818 = vmul.f32 %v1779, 1.442695
        %v1819 = vpow.pop %v1818
        %v1820 = vmul.f32 %v1780, 1.442695
        %v1821 = vpow.pop %v1820
        %v1822 = vmul.f32 %v1781, 1.442695
        %v1823 = vpow.pop %v1822
        %v1824 = vmul.f32 %v1782, 1.442695
        %v1825 = vpow.pop %v1824
        %v1826 = vmul.f32 %v1783, 1.442695
        %v1827 = vpow.pop %v1826
        %v1828 = vmul.f32 %v1784, 1.442695
        %v1829 = vpow.pop %v1828
        %v1830 = vmul.f32 %v1785, 1.442695
        %v1831 = vpow.pop %v1830
        %v1832 = vmul.f32 %v1786, 1.442695
        %v1833 = vpow.pop %v1832
        %v1834 = vmul.f32 %v1787, 1.442695
        %v1835 = vpow.pop %v1834
        %v1836 = vmul.f32 %v1788, 1.442695
        %v1837 = vpow.pop %v1836
        %v1838 = vmul.f32 %v1789, 1.442695
        %v1839 = vpow.pop %v1838
        %v1840 = vmul.f32 %v1790, 1.442695
        %v1841 = vpow.pop %v1840
        %v1842 = vmul.f32 %v1791, 1.442695
        %v1843 = vpow.pop %v1842
        %v1844 = vmul.f32 %v1792, 1.442695
        %v1845 = vpow.pop %v1844
        %v1846 = vmul.f32 %v1793, 1.442695
        %v1847 = vpow.pop %v1846
        %v1848 = vmul.f32 %v1794, 1.442695
        %v1849 = vpow.pop %v1848
        %v1850 = vmul.f32 %v1795, 1.442695
        %v1851 = vpow.pop %v1850
        %v1852 = vmul.f32 %v1796, 1.442695
        %v1853 = vpow.pop %v1852
        %v1854 = vmul.f32 %v1797, 1.442695
        %v1855 = vpow.pop %v1854
        %v1856 = vmul.f32 %v1798, 1.442695
        %v1857 = vpow.pop %v1856
        %v1858 = vmul.f32 %v1799, 1.442695
        %v1859 = vpow.pop %v1858
        %v1860 = vmul.f32 %v1800, 1.442695
        %v1861 = vpow.pop %v1860
        %v1862 = vmul.f32 %v1801, 1.442695
        %v1863 = vpow.pop %v1862
        %v1864 = vmul.f32 %v1802, 1.442695
        %v1865 = vpow.pop %v1864
        %v1866 = vmul.f32 %v1803, 1.442695
        %v1867 = vpow.pop %v1866
        %v1868 = vadd.f32 %v1805, %v1807
        %v1869 = vadd.f32 %v1868, %v1809
        %v1870 = vadd.f32 %v1869, %v1811
        %v1871 = vadd.f32 %v1870, %v1813
        %v1872 = vadd.f32 %v1871, %v1815
        %v1873 = vadd.f32 %v1872, %v1817
        %v1874 = vadd.f32 %v1873, %v1819
        %v1875 = vadd.f32 %v1874, %v1821
        %v1876 = vadd.f32 %v1875, %v1823
        %v1877 = vadd.f32 %v1876, %v1825
        %v1878 = vadd.f32 %v1877, %v1827
        %v1879 = vadd.f32 %v1878, %v1829
        %v1880 = vadd.f32 %v1879, %v1831
        %v1881 = vadd.f32 %v1880, %v1833
        %v1882 = vadd.f32 %v1881, %v1835
        %v1883 = vadd.f32 %v1882, %v1837
        %v1884 = vadd.f32 %v1883, %v1839
        %v1885 = vadd.f32 %v1884, %v1841
        %v1886 = vadd.f32 %v1885, %v1843
        %v1887 = vadd.f32 %v1886, %v1845
        %v1888 = vadd.f32 %v1887, %v1847
        %v1889 = vadd.f32 %v1888, %v1849
        %v1890 = vadd.f32 %v1889, %v1851
        %v1891 = vadd.f32 %v1890, %v1853
        %v1892 = vadd.f32 %v1891, %v1855
        %v1893 = vadd.f32 %v1892, %v1857
        %v1894 = vadd.f32 %v1893, %v1859
        %v1895 = vadd.f32 %v1894, %v1861
        %v1896 = vadd.f32 %v1895, %v1863
        %v1897 = vadd.f32 %v1896, %v1865
        %v1898 = vadd.f32 %v1897, %v1867
        %v1899 = vrot.slane %v1898, 4
        %v1900 = vadd.f32 %v1898, %v1899
        %v1901 = vrot.slane %v1900, 2
        %v1902 = vadd.f32 %v1900, %v1901
        %v1903 = vrot.slane %v1902, 1
        %v1904 = vadd.f32 %v1902, %v1903
        %v1905 = vrcp.pop %v1904
        %v1906 = vmul.f32 %v1805, %v1905
        %v1907 = vmul.f32 %v1807, %v1905
        %v1908 = vmul.f32 %v1809, %v1905
        %v1909 = vmul.f32 %v1811, %v1905
        %v1910 = vmul.f32 %v1813, %v1905
        %v1911 = vmul.f32 %v1815, %v1905
        %v1912 = vmul.f32 %v1817, %v1905
        %v1913 = vmul.f32 %v1819, %v1905
        %v1914 = vmul.f32 %v1821, %v1905
        %v1915 = vmul.f32 %v1823, %v1905
        %v1916 = vmul.f32 %v1825, %v1905
        %v1917 = vmul.f32 %v1827, %v1905
        %v1918 = vmul.f32 %v1829, %v1905
        %v1919 = vmul.f32 %v1831, %v1905
        %v1920 = vmul.f32 %v1833, %v1905
        %v1921 = vmul.f32 %v1835, %v1905
        %v1922 = vmul.f32 %v1837, %v1905
        %v1923 = vmul.f32 %v1839, %v1905
        %v1924 = vmul.f32 %v1841, %v1905
        %v1925 = vmul.f32 %v1843, %v1905
        %v1926 = vmul.f32 %v1845, %v1905
        %v1927 = vmul.f32 %v1847, %v1905
        %v1928 = vmul.f32 %v1849, %v1905
        %v1929 = vmul.f32 %v1851, %v1905
        %v1930 = vmul.f32 %v1853, %v1905
        %v1931 = vmul.f32 %v1855, %v1905
        %v1932 = vmul.f32 %v1857, %v1905
        %v1933 = vmul.f32 %v1859, %v1905
        %v1934 = vmul.f32 %v1861, %v1905
        %v1935 = vmul.f32 %v1863, %v1905
        %v1936 = vmul.f32 %v1865, %v1905
        %v1937 = vmul.f32 %v1867, %v1905
        %v1938 = vpack.c.bf16 %v1907, %v1906
        %v1939 = vpack.c.bf16 %v1909, %v1908
        %v1940 = vpack.c.bf16 %v1911, %v1910
        %v1941 = vpack.c.bf16 %v1913, %v1912
        %v1942 = vpack.c.bf16 %v1915, %v1914
        %v1943 = vpack.c.bf16 %v1917, %v1916
        %v1944 = vpack.c.bf16 %v1919, %v1918
        %v1945 = vpack.c.bf16 %v1921, %v1920
        %v1946 = vpack.c.bf16 %v1923, %v1922
        %v1947 = vpack.c.bf16 %v1925, %v1924
        %v1948 = vpack.c.bf16 %v1927, %v1926
        %v1949 = vpack.c.bf16 %v1929, %v1928
        %v1950 = vpack.c.bf16 %v1931, %v1930
        %v1951 = vpack.c.bf16 %v1933, %v1932
        %v1952 = vpack.c.bf16 %v1935, %v1934
        %v1953 = vpack.c.bf16 %v1937, %v1936
        %1954 = vmatprep.subr.bf16.mxu0 0
        %1955 = vmatpush1.bf16.msra.mxu0 %v1945
        %1956 = vmatprep.subr.bf16.mxu0 0
        %1957 = vmatpush1.bf16.msra.mxu0 %v1944
        %1958 = vmatprep.subr.bf16.mxu0 0
        %1959 = vmatpush1.bf16.msra.mxu0 %v1943
        %1960 = vmatprep.subr.bf16.mxu0 0
        %1961 = vmatpush1.bf16.msra.mxu0 %v1942
        %1962 = vmatprep.subr.bf16.mxu0 0
        %1963 = vmatpush1.bf16.msra.mxu0 %v1941
        %1964 = vmatprep.subr.bf16.mxu0 0
        %1965 = vmatpush1.bf16.msra.mxu0 %v1940
        %1966 = vmatprep.subr.bf16.mxu0 0
        %1967 = vmatpush1.bf16.msra.mxu0 %v1939
        %1968 = vmatprep.subr.bf16.mxu0 0
        %1969 = vmatpush1.bf16.msra.mxu0 %v1938
        %1970 = vmatprep.subr.bf16.mxu0 0
        %1971 = vmatpush2.bf16.msra.mxu0 %v1953
        %1972 = vmatprep.subr.bf16.mxu0 0
        %1973 = vmatpush2.bf16.msra.mxu0 %v1952
        %1974 = vmatprep.subr.bf16.mxu0 0
        %1975 = vmatpush2.bf16.msra.mxu0 %v1951
        %1976 = vmatprep.subr.bf16.mxu0 0
        %1977 = vmatpush2.bf16.msra.mxu0 %v1950
        %1978 = vmatprep.subr.bf16.mxu0 0
        %1979 = vmatpush2.bf16.msra.mxu0 %v1949
        %1980 = vmatprep.subr.bf16.mxu0 0
        %1981 = vmatpush2.bf16.msra.mxu0 %v1948
        %1982 = vmatprep.subr.bf16.mxu0 0
        %1983 = vmatpush2.bf16.msra.mxu0 %v1947
        %1984 = vmatprep.subr.bf16.mxu0 0
        %1985 = vmatpush2.bf16.msra.mxu0 %v1946
        %1986 = vmatprep.mubr.bf16.mxu0 %v1101
        %1987 = vmatmul.mubr.bf16.gmra.mxu0 %v1100
        %v1988 = vpop.f32.mrf.mxu0
        %v1989 = vadd.f32 0.0, %v1988
        %v1990 = vpop.f32.mrf.mxu0
        %v1991 = vpop.f32.mrf.mxu0
        %v1992 = vadd.f32 0.0, %v1991
        %v1993 = vpop.f32.mrf.mxu0
        %1994 = vmatprep.mubr.bf16.mxu0 %v1103
        %1995 = vmatmul.mubr.bf16.gmra.mxu0 %v1102
        %v1996 = vpop.f32.mrf.mxu0
        %v1997 = vadd.f32 0.0, %v1996
        %v1998 = vpop.f32.mrf.mxu0
        %v1999 = vpop.f32.mrf.mxu0
        %v2000 = vadd.f32 0.0, %v1999
        %v2001 = vpop.f32.mrf.mxu0
        %2002 = vmatprep.mubr.bf16.mxu0 %v1105
        %2003 = vmatmul.mubr.bf16.gmra.mxu0 %v1104
        %v2004 = vpop.f32.mrf.mxu0
        %v2005 = vadd.f32 0.0, %v2004
        %v2006 = vpop.f32.mrf.mxu0
        %v2007 = vpop.f32.mrf.mxu0
        %v2008 = vadd.f32 0.0, %v2007
        %v2009 = vpop.f32.mrf.mxu0
        %2010 = vmatprep.mubr.bf16.mxu0 %v1107
        %2011 = vmatmul.mubr.bf16.gmra.mxu0 %v1106
        %v2012 = vpop.f32.mrf.mxu0
        %v2013 = vadd.f32 0.0, %v2012
        %v2014 = vpop.f32.mrf.mxu0
        %v2015 = vpop.f32.mrf.mxu0
        %v2016 = vadd.f32 0.0, %v2015
        %v2017 = vpop.f32.mrf.mxu0
        %2018 = vdwg.mxu0
        %2019 = vst [vmem:[%s176 + $0x8] sm:$0xff] %v1989
        %2020 = vst [vmem:[%s176 + $0x18] sm:$0xff] %v1992
        %2021 = vst [vmem:[%s176 + $0x28] sm:$0xff] %v1997
        %2022 = vst [vmem:[%s176 + $0x38] sm:$0xff] %v2000
        %2023 = vst [vmem:[%s176 + $0x48] sm:$0xff] %v2005
        %2024 = vst [vmem:[%s176 + $0x58] sm:$0xff] %v2008
        %2025 = vst [vmem:[%s176 + $0x68] sm:$0xff] %v2013
        %2026 = vst [vmem:[%s176 + $0x78] sm:$0xff] %v2016
        %s2027 = sand.u32 %s75, 1
        %s2028 = scalar_lea.sflag [#allocation4], %s2027
        %s2029 = sand.u32 %s75, 1
        %s2030 = smul.addr %s2029, 128
        %s2031 = scalar_lea.vmem [#allocation7], %s2030
        // Predicated region
        $region37: #{tpu_custom_call.1} parent=27 // pred_check
          %p2032 = pneg %p85
        $region38: #{tpu_custom_call.1} parent=27 // pred_check_branch
          %2034 = sbr.rel (%p2032) target = $region40
        $region39: #{tpu_custom_call.1} parent=27 // pred_region
          %s2036 = ssub.s32 2048, 2048
          %2037 = vsyncadd %s2028, %s2036
          %s2038 = smul.addr %s20, 16
          %s2039 = smul.addr %s2038, 128
          %s2040 = scalar_lea.hbm %s2, %s2039
          %s2041 = sshll.u32 %s2031, 4
          %s2042 = int_to_ptr.vmem [resolvable:$true] %s2041
          %2047 = dma.vmem_to_hbm [thread:$0]  %s2042, 2048, %s2040, %s2028, 256, 256, 16
        $region40: #{tpu_custom_call.1} parent=27 // pred_fallthru
          _
      $region28: #{tpu_custom_call.1} parent=5 // pred_fallthru
        _
      %p2048 = scmp.le.s32.totalorder 2, %s15
      // Predicated region
      $region41: #{tpu_custom_call.1} parent=5 // pred_check
        %p2049 = pneg %p2048
      $region42: #{tpu_custom_call.1} parent=5 // pred_check_branch
        %2051 = sbr.rel (%p2049) target = $region44
      $region43: #{tpu_custom_call.1} parent=5 // pred_region
        %s2052 = ssub.s32 %s15, 2
        // Predicated region
        $region45: #{tpu_custom_call.1} parent=43 // pred_check
          %p2053 = pneg %p91
        $region46: #{tpu_custom_call.1} parent=43 // pred_check_branch
          %2055 = sbr.rel (%p2053) target = $region48
        $region47: #{tpu_custom_call.1} parent=43 // pred_region
          %s2056 = sand.u32 %s76, 1
          %s2057 = scalar_lea.sflag [#allocation4], %s2056
          %s2058 = sand.u32 %s76, 1
          %s2059 = smul.addr %s2058, 128
          %s2060 = scalar_lea.vmem [#allocation7], %s2059
          %2061 = dma.done %s2057, 2048
        $region48: #{tpu_custom_call.1} parent=43 // pred_fallthru
          _
      $region44: #{tpu_custom_call.1} parent=5 // pred_fallthru
        _
    $region6: #{tpu_custom_call.1} parent=1 // loop_footer
      %s19 = sadd.s32 1, %s15
    $region7: #{tpu_custom_call.1} parent=1 // loop_footer_branch
      %14 = sbr.rel target = $region3
    $region8: #{tpu_custom_call.1} parent=1 // loop_exit
      _
    %2062 = vsyncpa [#allocation3], 1
    %s2063 = scalar_lea.sflag [#allocation3], 1
    %2064 = vsyncpa %s2063, 1
    %2065 = vsyncpa [#allocation6], 1
    %2066 = vsyncpa [#allocation4], 1
    %s2067 = scalar_lea.sflag [#allocation4], 1
    %2068 = vsyncpa %s2067, 1

</llo_original>
